<compile_context>
chip_gen: v7x
topology: tpu7x:2x2x1
jax: 0.10.0
libtpu: 0.0.40
codegen_flags: <defaults>
</compile_context>

<pallas_src>
import functools

import jax
import jax.numpy as jnp
from jax import lax
from jax.experimental import pallas as pl
from jax.experimental.pallas import tpu as pltpu


def _round_up(x, m):
    return (x + m - 1) // m * m


def _cdiv(a, b):
    return -(-a // b)


def _im2col_3x3(x2d, mask, W, cdtype):
    """x2d: (C, BHW) f32; mask: (8, BHW) f32 multiplicative boundary masks.

    Returns (9*C, BHW) in `cdtype`: row k*C + c holds channel c shifted by tap
    k = 3*ky + kx of a 3x3 'SAME' (zero padded) window.  Shifts are static lane
    rotations of the flattened, image-major spatial axis; the precomputed mask
    zeroes both the zero-padding border and any cross-image wraparound, so
    packing several images into the lane axis stays correct.
    """
    C, BHW = x2d.shape
    taps = []
    m = 0
    for ky in range(3):
        for kx in range(3):
            dy, dx = ky - 1, kx - 1
            if dy == 0 and dx == 0:
                taps.append(x2d.astype(cdtype))          # centre tap: no mask needed
                continue
            shift = (-(dy * W + dx)) % BHW
            rolled = pltpu.roll(x2d, shift, axis=1)
            taps.append((rolled * mask[m:m + 1, :]).astype(cdtype))
            m += 1
    return jnp.concatenate(taps, axis=0)                 # (9*C, BHW)


def _dead_preact_block_kernel(x_ref, w1s_ref, w2_ref, s1_ref, b1_ref, b2_ref,
                              mask_ref, o_ref, *, W, Pp, matmul_dtype):
    x = x_ref[0]                                         # (Cp, BHW) f32
    mask = mask_ref[...]                                 # (8, BHW) f32

    # a = relu(bn1(x)); BN (eval / running stats) folded to per-channel scale/bias.
    a = jnp.maximum(x * s1_ref[...] + b1_ref[...], 0.0)

    # conv1 (3x3 SAME) and the 1x1 shortcut in ONE matmul:
    # LHS = [w1 * bn2_scale ; shortcut-weights-at-centre-tap]  -> (2*Pp, 9*Cp).
    col1 = _im2col_3x3(a, mask, W, matmul_dtype)
    both = jnp.dot(w1s_ref[...], col1, preferred_element_type=jnp.float32)
    acc1 = both[:Pp]                                     # conv1 output (bn2-scaled)
    shortcut = both[Pp:]                                 # 1x1 shortcut output

    # relu(bn2(conv1)): scale already folded into w1; only the bias remains.
    b = jnp.maximum(acc1 + b2_ref[...], 0.0)

    # conv2 (3x3 SAME); the eval-mode (1 - death_rate) scale is folded into w2.
    col2 = _im2col_3x3(b, mask, W, matmul_dtype)
    acc2 = jnp.dot(w2_ref[...], col2, preferred_element_type=jnp.float32)

    o_ref[0] = (acc2 + shortcut).astype(o_ref.dtype)


def dead_preact_block(x_nchw, params, *, death_rate=0.25, eps=1e-5,
                      batch_tile=None, matmul_dtype=jnp.bfloat16, out_dtype=None):
    """Eval-mode forward of DeadPreActBlock (stride=1, 1x1 shortcut conv).

    x_nchw: (N, Cin, H, W).  params use PyTorch layouts (OIHW weights).
    matmul_dtype: MXU operand dtype; bf16 by default, pass jnp.float32 for
    tighter numerics (essentially free at overhead-bound shapes).
    """
    (w1, w2, ws, g1, beta1, m1, v1, g2, beta2, m2, v2) = params
    N, Cin, H, W = x_nchw.shape
    P = w1.shape[0]
    HW = H * W
    f32 = jnp.float32
    out_dtype = x_nchw.dtype if out_dtype is None else out_dtype

    # Channel padding granularity follows the matmul dtype's native sublane tile
    # (bf16 tiles are (16, 128)), so the im2col concat is a pure relabel.
    cbytes = jnp.dtype(matmul_dtype).itemsize
    sub = 16 if cbytes == 2 else 8
    Cp = _round_up(Cin, sub)
    Pp = _round_up(P, sub)

    # Pack `batch_tile` images into the lane axis per grid step.  Default targets
    # a grid of <= 2 "parallel" steps: amortises per-step overhead over the
    # (half-)batch while still giving both v7x TensorCores work.
    if batch_tile is None:
        batch_tile = max(1, _cdiv(N, 2))
    G = _cdiv(N, batch_tile)
    Np = G * batch_tile
    BHW = batch_tile * HW

    # Fold BatchNorm (eval / running stats) into per-channel scale & bias.
    scale1 = (g1 / jnp.sqrt(v1 + eps)).astype(f32)
    bias1 = (beta1 - m1 * scale1).astype(f32)
    scale2 = (g2 / jnp.sqrt(v2 + eps)).astype(f32)
    bias2 = (beta2 - m2 * scale2).astype(f32)

    s1 = jnp.pad(scale1, (0, Cp - Cin)).reshape(Cp, 1)
    b1 = jnp.pad(bias1, (0, Cp - Cin)).reshape(Cp, 1)
    b2 = jnp.pad(bias2, (0, Pp - P)).reshape(Pp, 1)

    # Activations: NCHW -> (G, Cp, batch_tile*HW): channels-major, images packed
    # image-major into the lane axis.  Layout plumbing stays in XLA.
    x = jnp.pad(x_nchw.astype(f32),
                ((0, Np - N), (0, Cp - Cin), (0, 0), (0, 0))).reshape(Np, Cp, HW)
    x = x.reshape(G, batch_tile, Cp, HW).transpose(0, 2, 1, 3).reshape(G, Cp, BHW)

    # conv1: OIHW -> (P, ky, kx, Cin), fold bn2 scale over output rows, pad, pack.
    w1_f = jnp.transpose(w1.astype(f32), (0, 2, 3, 1)) * scale2[:, None, None, None]
    w1_f = jnp.pad(w1_f, ((0, Pp - P), (0, 0), (0, 0), (0, Cp - Cin)))
    w1_rows = w1_f.reshape(Pp, 9 * Cp)

    # 1x1 shortcut conv embedded at the centre tap (k = 4) of a second row block.
    ws_f = jnp.pad(ws[:, :, 0, 0].astype(f32), ((0, Pp - P), (0, Cp - Cin)))
    sc_rows = jnp.zeros((Pp, 9, Cp), f32).at[:, 4, :].set(ws_f).reshape(Pp, 9 * Cp)

    w1s = jnp.concatenate([w1_rows, sc_rows], axis=0).astype(matmul_dtype)  # (2Pp, 9Cp)

    # conv2: OIHW -> (Pp, 9*Pp), with the eval-mode (1 - death_rate) folded in.
    w2_f = jnp.transpose(w2.astype(f32), (0, 2, 3, 1)) * (1.0 - float(death_rate))
    w2_f = jnp.pad(w2_f, ((0, Pp - P), (0, 0), (0, 0), (0, Pp - P)))
    w2_p = w2_f.reshape(Pp, 9 * Pp).astype(matmul_dtype)

    # Precomputed multiplicative boundary masks, one row per non-centre tap,
    # tiled per image so cross-image wraparound of the lane rolls is zeroed.
    h = jnp.repeat(jnp.arange(H, dtype=jnp.int32), W)
    w = jnp.tile(jnp.arange(W, dtype=jnp.int32), H)
    rows = []
    for ky in range(3):
        for kx in range(3):
            dy, dx = ky - 1, kx - 1
            if dy == 0 and dx == 0:
                continue
            rows.append((h + dy >= 0) & (h + dy < H) & (w + dx >= 0) & (w + dx < W))
    mask = jnp.stack(rows, 0).astype(f32)                # (8, HW)
    mask = jnp.tile(mask, (1, batch_tile))               # (8, BHW)

    # Right-sized VMEM limit (double-buffered blocks + live intermediates, 4x margin).
    obytes = jnp.dtype(out_dtype).itemsize
    block_bytes = (Cp * BHW * 4                          # x tile
                   + 2 * Pp * 9 * Cp * cbytes            # fused conv1+shortcut weights
                   + Pp * 9 * Pp * cbytes                # conv2 weights
                   + 8 * BHW * 4                         # masks
                   + (2 * Cp + Pp) * 4                   # scales / biases
                   + Pp * BHW * obytes)                  # output tile
    live_bytes = ((9 * Cp + 9 * Pp) * BHW * cbytes       # im2col operands
                  + (Cp + 3 * Pp) * BHW * 4)             # a, acc1, shortcut, acc2/b
    vmem_limit = int(min(96 * 1024 * 1024,
                         max(4 * 1024 * 1024, 4 * (block_bytes + live_bytes))))

    out = pl.pallas_call(
        functools.partial(_dead_preact_block_kernel, W=W, Pp=Pp,
                          matmul_dtype=matmul_dtype),
        out_shape=jax.ShapeDtypeStruct((G, Pp, BHW), out_dtype),
        grid=(G,),
        in_specs=[
            pl.BlockSpec((1, Cp, BHW), lambda g: (g, 0, 0)),      # x (channels-major)
            pl.BlockSpec((2 * Pp, 9 * Cp), lambda g: (0, 0)),     # conv1 + shortcut LHS
            pl.BlockSpec((Pp, 9 * Pp), lambda g: (0, 0)),         # conv2 weights
            pl.BlockSpec((Cp, 1), lambda g: (0, 0)),              # bn1 scale
            pl.BlockSpec((Cp, 1), lambda g: (0, 0)),              # bn1 bias
            pl.BlockSpec((Pp, 1), lambda g: (0, 0)),              # bn2 bias
            pl.BlockSpec((8, BHW), lambda g: (0, 0)),             # boundary masks
        ],
        out_specs=pl.BlockSpec((1, Pp, BHW), lambda g: (g, 0, 0)),  # lane-dense output
        compiler_params=pltpu.CompilerParams(
            dimension_semantics=("parallel",),   # batch-tile axis: pipelined / megacore
            vmem_limit_bytes=vmem_limit,
        ),
    )(x, w1s, w2_p, s1, b1, b2, mask)

    # (G, Pp, batch_tile*HW) -> NCHW, drop batch/channel padding (XLA-side plumbing).
    out = out.reshape(G, Pp, batch_tile, HW).transpose(0, 2, 1, 3).reshape(Np, Pp, HW)
    return out[:N, :P, :].reshape(N, P, H, W)


def _reference_forward(x_nchw, params, *, death_rate=0.25, eps=1e-5):
    """Plain-JAX f32 reference (same math, lax conv) for the correctness check."""
    (w1, w2, ws, g1, beta1, m1, v1, g2, beta2, m2, v2) = params
    Cin = x_nchw.shape[1]
    P = w1.shape[0]
    dn = ('NHWC', 'HWIO', 'NHWC')
    x = jnp.transpose(x_nchw, (0, 2, 3, 1)).astype(jnp.float32)
    s1 = (g1 / jnp.sqrt(v1 + eps)).reshape(1, 1, 1, Cin)
    b1 = (beta1 - m1 * (g1 / jnp.sqrt(v1 + eps))).reshape(1, 1, 1, Cin)
    s2 = (g2 / jnp.sqrt(v2 + eps)).reshape(1, 1, 1, P)
    b2 = (beta2 - m2 * (g2 / jnp.sqrt(v2 + eps))).reshape(1, 1, 1, P)
    a = jnp.maximum(x * s1 + b1, 0.0)
    sc = lax.conv_general_dilated(
        a, jnp.transpose(ws, (2, 3, 1, 0)), (1, 1), 'SAME', dimension_numbers=dn)
    o = lax.conv_general_dilated(
        a, jnp.transpose(w1, (2, 3, 1, 0)), (1, 1), 'SAME', dimension_numbers=dn)
    o = jnp.maximum(o * s2 + b2, 0.0)
    o = lax.conv_general_dilated(
        o, jnp.transpose(w2, (2, 3, 1, 0)), (1, 1), 'SAME', dimension_numbers=dn)
    o = o * (1.0 - death_rate) + sc
    return jnp.transpose(o, (0, 3, 1, 2))


if __name__ == "__main__":
    # in_planes=4, planes=8, stride=1 (1x1 shortcut conv exists).  N=4 so the
    # default batch_tile=2 exercises lane-axis batch packing with a 2-step grid.
    N, Cin, H, W = 4, 4, 16, 16
    P = 8
    death_rate = 0.25

    key = jax.random.PRNGKey(0)
    ks = jax.random.split(key, 12)
    x = jax.random.normal(ks[0], (N, Cin, H, W), jnp.float32)
    w1 = jax.random.normal(ks[1], (P, Cin, 3, 3), jnp.float32) * 0.1     # conv1 OIHW
    w2 = jax.random.normal(ks[2], (P, P, 3, 3), jnp.float32) * 0.1       # conv2 OIHW
    ws = jax.random.normal(ks[3], (P, Cin, 1, 1), jnp.float32) * 0.1     # shortcut OIHW
    g1 = 1.0 + 0.1 * jax.random.normal(ks[4], (Cin,), jnp.float32)       # bn1 weight
    beta1 = 0.1 * jax.random.normal(ks[5], (Cin,), jnp.float32)          # bn1 bias
    m1 = 0.1 * jax.random.normal(ks[6], (Cin,), jnp.float32)             # bn1 running_mean
    v1 = jax.random.uniform(ks[7], (Cin,), jnp.float32, 0.5, 1.5)        # bn1 running_var
    g2 = 1.0 + 0.1 * jax.random.normal(ks[8], (P,), jnp.float32)
    beta2 = 0.1 * jax.random.normal(ks[9], (P,), jnp.float32)
    m2 = 0.1 * jax.random.normal(ks[10], (P,), jnp.float32)
    v2 = jax.random.uniform(ks[11], (P,), jnp.float32, 0.5, 1.5)
    params = (w1, w2, ws, g1, beta1, m1, v1, g2, beta2, m2, v2)

    fwd = jax.jit(functools.partial(dead_preact_block, death_rate=death_rate))
    out = jax.block_until_ready(fwd(x, params))

    ref = _reference_forward(x, params, death_rate=death_rate)
    assert out.shape == (N, P, H, W), out.shape
    max_err = float(jnp.max(jnp.abs(out - ref)))
    # Loose-ish tolerance: bf16 MXU operands (f32 accumulation) by default.
    assert jnp.allclose(out, ref, atol=5e-2, rtol=5e-2), f"max abs err = {max_err}"

    print("KERNEL_OK")
</pallas_src>

<mosaic_0001>
module attributes {stable_mosaic.version = 11 : i64} {
  func.func @_dead_preact_block_kernel(%arg0: i32, %arg1: memref<1x16x512xf32, #tpu.memory_space<vmem>>, %arg2: memref<32x144xbf16, #tpu.memory_space<vmem>>, %arg3: memref<16x144xbf16, #tpu.memory_space<vmem>>, %arg4: memref<16x1xf32, #tpu.memory_space<vmem>>, %arg5: memref<16x1xf32, #tpu.memory_space<vmem>>, %arg6: memref<16x1xf32, #tpu.memory_space<vmem>>, %arg7: memref<8x512xf32, #tpu.memory_space<vmem>>, %arg8: memref<1x16x512xf32, #tpu.memory_space<vmem>>) attributes {dimension_semantics = [#tpu.dimension_semantics<parallel>], iteration_bounds = array<i64: 2>, scalar_prefetch = 0 : i64, scratch_operands = 0 : i64, tpu.core_type = #tpu.core_type<tc>, window_params = [{transform_indices = @transform_0, window_bounds = array<i64: 1, 16, 512>}, {pipeline_mode = #tpu.pipeline_mode<synchronous>, transform_indices = @transform_1, window_bounds = array<i64: 32, 144>}, {pipeline_mode = #tpu.pipeline_mode<synchronous>, transform_indices = @transform_2, window_bounds = array<i64: 16, 144>}, {pipeline_mode = #tpu.pipeline_mode<synchronous>, transform_indices = @transform_3, window_bounds = array<i64: 16, 1>}, {pipeline_mode = #tpu.pipeline_mode<synchronous>, transform_indices = @transform_4, window_bounds = array<i64: 16, 1>}, {pipeline_mode = #tpu.pipeline_mode<synchronous>, transform_indices = @transform_5, window_bounds = array<i64: 16, 1>}, {pipeline_mode = #tpu.pipeline_mode<synchronous>, transform_indices = @transform_6, window_bounds = array<i64: 8, 512>}, {transform_indices = @transform_7, window_bounds = array<i64: 1, 16, 512>}]} {
    %c0 = arith.constant 0 : index
    %c0_0 = arith.constant 0 : index
    %c0_1 = arith.constant 0 : index
    %0 = vector.load %arg1[%c0, %c0_0, %c0_1] : memref<1x16x512xf32, #tpu.memory_space<vmem>>, vector<1x16x512xf32>
    %1 = vector.shape_cast %0 : vector<1x16x512xf32> to vector<16x512xf32>
    %c0_2 = arith.constant 0 : index
    %c0_3 = arith.constant 0 : index
    %2 = vector.load %arg7[%c0_2, %c0_3] : memref<8x512xf32, #tpu.memory_space<vmem>>, vector<8x512xf32>
    %c0_4 = arith.constant 0 : index
    %c0_5 = arith.constant 0 : index
    %3 = vector.load %arg4[%c0_4, %c0_5] : memref<16x1xf32, #tpu.memory_space<vmem>>, vector<16x1xf32>
    %4 = vector.broadcast %3 : vector<16x1xf32> to vector<16x512xf32>
    %5 = arith.mulf %1, %4 : vector<16x512xf32>
    %c0_6 = arith.constant 0 : index
    %c0_7 = arith.constant 0 : index
    %6 = vector.load %arg5[%c0_6, %c0_7] : memref<16x1xf32, #tpu.memory_space<vmem>>, vector<16x1xf32>
    %7 = vector.broadcast %6 : vector<16x1xf32> to vector<16x512xf32>
    %8 = arith.addf %5, %7 : vector<16x512xf32>
    %cst = arith.constant 0.000000e+00 : f32
    %9 = vector.broadcast %cst : f32 to vector<16x512xf32>
    %10 = arith.maximumf %8, %9 : vector<16x512xf32>
    %c17_i32 = arith.constant 17 : i32
    %11 = tpu.dynamic_rotate %10 by %c17_i32 dim 1 : vector<16x512xf32>, i32 -> vector<16x512xf32>
    %12 = vector.extract_strided_slice %2 {offsets = [0, 0], sizes = [1, 512], strides = [1, 1]} : vector<8x512xf32> to vector<1x512xf32>
    %13 = vector.broadcast %12 : vector<1x512xf32> to vector<16x512xf32>
    %14 = arith.mulf %11, %13 : vector<16x512xf32>
    %15 = arith.truncf %14 : vector<16x512xf32> to vector<16x512xbf16>
    %c16_i32 = arith.constant 16 : i32
    %16 = tpu.dynamic_rotate %10 by %c16_i32 dim 1 : vector<16x512xf32>, i32 -> vector<16x512xf32>
    %17 = vector.extract_strided_slice %2 {offsets = [1, 0], sizes = [1, 512], strides = [1, 1]} : vector<8x512xf32> to vector<1x512xf32>
    %18 = vector.broadcast %17 : vector<1x512xf32> to vector<16x512xf32>
    %19 = arith.mulf %16, %18 : vector<16x512xf32>
    %20 = arith.truncf %19 : vector<16x512xf32> to vector<16x512xbf16>
    %c15_i32 = arith.constant 15 : i32
    %21 = tpu.dynamic_rotate %10 by %c15_i32 dim 1 : vector<16x512xf32>, i32 -> vector<16x512xf32>
    %22 = vector.extract_strided_slice %2 {offsets = [2, 0], sizes = [1, 512], strides = [1, 1]} : vector<8x512xf32> to vector<1x512xf32>
    %23 = vector.broadcast %22 : vector<1x512xf32> to vector<16x512xf32>
    %24 = arith.mulf %21, %23 : vector<16x512xf32>
    %25 = arith.truncf %24 : vector<16x512xf32> to vector<16x512xbf16>
    %c1_i32 = arith.constant 1 : i32
    %26 = tpu.dynamic_rotate %10 by %c1_i32 dim 1 : vector<16x512xf32>, i32 -> vector<16x512xf32>
    %27 = vector.extract_strided_slice %2 {offsets = [3, 0], sizes = [1, 512], strides = [1, 1]} : vector<8x512xf32> to vector<1x512xf32>
    %28 = vector.broadcast %27 : vector<1x512xf32> to vector<16x512xf32>
    %29 = arith.mulf %26, %28 : vector<16x512xf32>
    %30 = arith.truncf %29 : vector<16x512xf32> to vector<16x512xbf16>
    %31 = arith.truncf %10 : vector<16x512xf32> to vector<16x512xbf16>
    %c511_i32 = arith.constant 511 : i32
    %32 = tpu.dynamic_rotate %10 by %c511_i32 dim 1 : vector<16x512xf32>, i32 -> vector<16x512xf32>
    %33 = vector.extract_strided_slice %2 {offsets = [4, 0], sizes = [1, 512], strides = [1, 1]} : vector<8x512xf32> to vector<1x512xf32>
    %34 = vector.broadcast %33 : vector<1x512xf32> to vector<16x512xf32>
    %35 = arith.mulf %32, %34 : vector<16x512xf32>
    %36 = arith.truncf %35 : vector<16x512xf32> to vector<16x512xbf16>
    %c497_i32 = arith.constant 497 : i32
    %37 = tpu.dynamic_rotate %10 by %c497_i32 dim 1 : vector<16x512xf32>, i32 -> vector<16x512xf32>
    %38 = vector.extract_strided_slice %2 {offsets = [5, 0], sizes = [1, 512], strides = [1, 1]} : vector<8x512xf32> to vector<1x512xf32>
    %39 = vector.broadcast %38 : vector<1x512xf32> to vector<16x512xf32>
    %40 = arith.mulf %37, %39 : vector<16x512xf32>
    %41 = arith.truncf %40 : vector<16x512xf32> to vector<16x512xbf16>
    %c496_i32 = arith.constant 496 : i32
    %42 = tpu.dynamic_rotate %10 by %c496_i32 dim 1 : vector<16x512xf32>, i32 -> vector<16x512xf32>
    %43 = vector.extract_strided_slice %2 {offsets = [6, 0], sizes = [1, 512], strides = [1, 1]} : vector<8x512xf32> to vector<1x512xf32>
    %44 = vector.broadcast %43 : vector<1x512xf32> to vector<16x512xf32>
    %45 = arith.mulf %42, %44 : vector<16x512xf32>
    %46 = arith.truncf %45 : vector<16x512xf32> to vector<16x512xbf16>
    %c495_i32 = arith.constant 495 : i32
    %47 = tpu.dynamic_rotate %10 by %c495_i32 dim 1 : vector<16x512xf32>, i32 -> vector<16x512xf32>
    %48 = vector.extract_strided_slice %2 {offsets = [7, 0], sizes = [1, 512], strides = [1, 1]} : vector<8x512xf32> to vector<1x512xf32>
    %49 = vector.broadcast %48 : vector<1x512xf32> to vector<16x512xf32>
    %50 = arith.mulf %47, %49 : vector<16x512xf32>
    %51 = arith.truncf %50 : vector<16x512xf32> to vector<16x512xbf16>
    %52 = tpu.concatenate %15, %20, %25, %30, %31, %36, %41, %46, %51 in 0 : vector<16x512xbf16>, vector<16x512xbf16>, vector<16x512xbf16>, vector<16x512xbf16>, vector<16x512xbf16>, vector<16x512xbf16>, vector<16x512xbf16>, vector<16x512xbf16>, vector<16x512xbf16> -> vector<144x512xbf16>
    %c0_8 = arith.constant 0 : index
    %c0_9 = arith.constant 0 : index
    %53 = vector.load %arg2[%c0_8, %c0_9] : memref<32x144xbf16, #tpu.memory_space<vmem>>, vector<32x144xbf16>
    %cst_10 = arith.constant dense<0.000000e+00> : vector<32x512xf32>
    %54 = tpu.matmul %53, %52, %cst_10 {dimension_numbers = #tpu.dot_dimension_numbers<[1], [0], [0], [1], [0, 0, 1, 1], [], []>} : vector<32x144xbf16>, vector<144x512xbf16>, vector<32x512xf32> -> vector<32x512xf32>
    %55 = vector.extract_strided_slice %54 {offsets = [0, 0], sizes = [16, 512], strides = [1, 1]} : vector<32x512xf32> to vector<16x512xf32>
    %56 = vector.extract_strided_slice %54 {offsets = [16, 0], sizes = [16, 512], strides = [1, 1]} : vector<32x512xf32> to vector<16x512xf32>
    %c0_11 = arith.constant 0 : index
    %c0_12 = arith.constant 0 : index
    %57 = vector.load %arg6[%c0_11, %c0_12] : memref<16x1xf32, #tpu.memory_space<vmem>>, vector<16x1xf32>
    %58 = vector.broadcast %57 : vector<16x1xf32> to vector<16x512xf32>
    %59 = arith.addf %55, %58 : vector<16x512xf32>
    %cst_13 = arith.constant 0.000000e+00 : f32
    %60 = vector.broadcast %cst_13 : f32 to vector<16x512xf32>
    %61 = arith.maximumf %59, %60 : vector<16x512xf32>
    %c17_i32_14 = arith.constant 17 : i32
    %62 = tpu.dynamic_rotate %61 by %c17_i32_14 dim 1 : vector<16x512xf32>, i32 -> vector<16x512xf32>
    %63 = vector.extract_strided_slice %2 {offsets = [0, 0], sizes = [1, 512], strides = [1, 1]} : vector<8x512xf32> to vector<1x512xf32>
    %64 = vector.broadcast %63 : vector<1x512xf32> to vector<16x512xf32>
    %65 = arith.mulf %62, %64 : vector<16x512xf32>
    %66 = arith.truncf %65 : vector<16x512xf32> to vector<16x512xbf16>
    %c16_i32_15 = arith.constant 16 : i32
    %67 = tpu.dynamic_rotate %61 by %c16_i32_15 dim 1 : vector<16x512xf32>, i32 -> vector<16x512xf32>
    %68 = vector.extract_strided_slice %2 {offsets = [1, 0], sizes = [1, 512], strides = [1, 1]} : vector<8x512xf32> to vector<1x512xf32>
    %69 = vector.broadcast %68 : vector<1x512xf32> to vector<16x512xf32>
    %70 = arith.mulf %67, %69 : vector<16x512xf32>
    %71 = arith.truncf %70 : vector<16x512xf32> to vector<16x512xbf16>
    %c15_i32_16 = arith.constant 15 : i32
    %72 = tpu.dynamic_rotate %61 by %c15_i32_16 dim 1 : vector<16x512xf32>, i32 -> vector<16x512xf32>
    %73 = vector.extract_strided_slice %2 {offsets = [2, 0], sizes = [1, 512], strides = [1, 1]} : vector<8x512xf32> to vector<1x512xf32>
    %74 = vector.broadcast %73 : vector<1x512xf32> to vector<16x512xf32>
    %75 = arith.mulf %72, %74 : vector<16x512xf32>
    %76 = arith.truncf %75 : vector<16x512xf32> to vector<16x512xbf16>
    %c1_i32_17 = arith.constant 1 : i32
    %77 = tpu.dynamic_rotate %61 by %c1_i32_17 dim 1 : vector<16x512xf32>, i32 -> vector<16x512xf32>
    %78 = vector.extract_strided_slice %2 {offsets = [3, 0], sizes = [1, 512], strides = [1, 1]} : vector<8x512xf32> to vector<1x512xf32>
    %79 = vector.broadcast %78 : vector<1x512xf32> to vector<16x512xf32>
    %80 = arith.mulf %77, %79 : vector<16x512xf32>
    %81 = arith.truncf %80 : vector<16x512xf32> to vector<16x512xbf16>
    %82 = arith.truncf %61 : vector<16x512xf32> to vector<16x512xbf16>
    %c511_i32_18 = arith.constant 511 : i32
    %83 = tpu.dynamic_rotate %61 by %c511_i32_18 dim 1 : vector<16x512xf32>, i32 -> vector<16x512xf32>
    %84 = vector.extract_strided_slice %2 {offsets = [4, 0], sizes = [1, 512], strides = [1, 1]} : vector<8x512xf32> to vector<1x512xf32>
    %85 = vector.broadcast %84 : vector<1x512xf32> to vector<16x512xf32>
    %86 = arith.mulf %83, %85 : vector<16x512xf32>
    %87 = arith.truncf %86 : vector<16x512xf32> to vector<16x512xbf16>
    %c497_i32_19 = arith.constant 497 : i32
    %88 = tpu.dynamic_rotate %61 by %c497_i32_19 dim 1 : vector<16x512xf32>, i32 -> vector<16x512xf32>
    %89 = vector.extract_strided_slice %2 {offsets = [5, 0], sizes = [1, 512], strides = [1, 1]} : vector<8x512xf32> to vector<1x512xf32>
    %90 = vector.broadcast %89 : vector<1x512xf32> to vector<16x512xf32>
    %91 = arith.mulf %88, %90 : vector<16x512xf32>
    %92 = arith.truncf %91 : vector<16x512xf32> to vector<16x512xbf16>
    %c496_i32_20 = arith.constant 496 : i32
    %93 = tpu.dynamic_rotate %61 by %c496_i32_20 dim 1 : vector<16x512xf32>, i32 -> vector<16x512xf32>
    %94 = vector.extract_strided_slice %2 {offsets = [6, 0], sizes = [1, 512], strides = [1, 1]} : vector<8x512xf32> to vector<1x512xf32>
    %95 = vector.broadcast %94 : vector<1x512xf32> to vector<16x512xf32>
    %96 = arith.mulf %93, %95 : vector<16x512xf32>
    %97 = arith.truncf %96 : vector<16x512xf32> to vector<16x512xbf16>
    %c495_i32_21 = arith.constant 495 : i32
    %98 = tpu.dynamic_rotate %61 by %c495_i32_21 dim 1 : vector<16x512xf32>, i32 -> vector<16x512xf32>
    %99 = vector.extract_strided_slice %2 {offsets = [7, 0], sizes = [1, 512], strides = [1, 1]} : vector<8x512xf32> to vector<1x512xf32>
    %100 = vector.broadcast %99 : vector<1x512xf32> to vector<16x512xf32>
    %101 = arith.mulf %98, %100 : vector<16x512xf32>
    %102 = arith.truncf %101 : vector<16x512xf32> to vector<16x512xbf16>
    %103 = tpu.concatenate %66, %71, %76, %81, %82, %87, %92, %97, %102 in 0 : vector<16x512xbf16>, vector<16x512xbf16>, vector<16x512xbf16>, vector<16x512xbf16>, vector<16x512xbf16>, vector<16x512xbf16>, vector<16x512xbf16>, vector<16x512xbf16>, vector<16x512xbf16> -> vector<144x512xbf16>
    %c0_22 = arith.constant 0 : index
    %c0_23 = arith.constant 0 : index
    %104 = vector.load %arg3[%c0_22, %c0_23] : memref<16x144xbf16, #tpu.memory_space<vmem>>, vector<16x144xbf16>
    %cst_24 = arith.constant dense<0.000000e+00> : vector<16x512xf32>
    %105 = tpu.matmul %104, %103, %cst_24 {dimension_numbers = #tpu.dot_dimension_numbers<[1], [0], [0], [1], [0, 0, 1, 1], [], []>} : vector<16x144xbf16>, vector<144x512xbf16>, vector<16x512xf32> -> vector<16x512xf32>
    %106 = arith.addf %105, %56 : vector<16x512xf32>
    %c0_25 = arith.constant 0 : index
    %c0_26 = arith.constant 0 : index
    %c0_27 = arith.constant 0 : index
    %107 = vector.load %arg8[%c0_25, %c0_26, %c0_27] : memref<1x16x512xf32, #tpu.memory_space<vmem>>, vector<1x16x512xf32>
    %108 = vector.shape_cast %107 : vector<1x16x512xf32> to vector<16x512xf32>
    %109 = vector.shape_cast %106 : vector<16x512xf32> to vector<1x16x512xf32>
    tpu.vector_store %arg8[%c0_25, %c0_26, %c0_27], %109 {strides = array<i32>} : memref<1x16x512xf32, #tpu.memory_space<vmem>>, vector<1x16x512xf32>,
    return
  }
  func.func @transform_0(%arg0: i32) -> (i32, i32, i32) {
    %c0_i32 = arith.constant 0 : i32
    %c0_i32_0 = arith.constant 0 : i32
    %c0_i32_1 = arith.constant 0 : i32
    return %arg0, %c0_i32, %c0_i32_0 : i32, i32, i32
  }
  func.func @transform_1(%arg0: i32) -> (i32, i32) {
    %c0_i32 = arith.constant 0 : i32
    %c0_i32_0 = arith.constant 0 : i32
    %c0_i32_1 = arith.constant 0 : i32
    return %c0_i32, %c0_i32_0 : i32, i32
  }
  func.func @transform_2(%arg0: i32) -> (i32, i32) {
    %c0_i32 = arith.constant 0 : i32
    %c0_i32_0 = arith.constant 0 : i32
    %c0_i32_1 = arith.constant 0 : i32
    return %c0_i32, %c0_i32_0 : i32, i32
  }
  func.func @transform_3(%arg0: i32) -> (i32, i32) {
    %c0_i32 = arith.constant 0 : i32
    %c0_i32_0 = arith.constant 0 : i32
    %c0_i32_1 = arith.constant 0 : i32
    return %c0_i32, %c0_i32_0 : i32, i32
  }
  func.func @transform_4(%arg0: i32) -> (i32, i32) {
    %c0_i32 = arith.constant 0 : i32
    %c0_i32_0 = arith.constant 0 : i32
    %c0_i32_1 = arith.constant 0 : i32
    return %c0_i32, %c0_i32_0 : i32, i32
  }
  func.func @transform_5(%arg0: i32) -> (i32, i32) {
    %c0_i32 = arith.constant 0 : i32
    %c0_i32_0 = arith.constant 0 : i32
    %c0_i32_1 = arith.constant 0 : i32
    return %c0_i32, %c0_i32_0 : i32, i32
  }
  func.func @transform_6(%arg0: i32) -> (i32, i32) {
    %c0_i32 = arith.constant 0 : i32
    %c0_i32_0 = arith.constant 0 : i32
    %c0_i32_1 = arith.constant 0 : i32
    return %c0_i32, %c0_i32_0 : i32, i32
  }
  func.func @transform_7(%arg0: i32) -> (i32, i32, i32) {
    %c0_i32 = arith.constant 0 : i32
    %c0_i32_0 = arith.constant 0 : i32
    %c0_i32_1 = arith.constant 0 : i32
    return %arg0, %c0_i32, %c0_i32_0 : i32, i32, i32
  }
}

</mosaic_0001>

<llo_original>
// kernel: dead_preact_block.1
$region0: #{dead_preact_block.1}
  #allocation0 [shape = 'u32[]', space=smem, size = 0x4, offset = 0x4, fixed_abs, tag = 'smem constant byte address 0x4 - core index']
  #allocation1 [shape = 'u32[144,128]{1,0:T(1,128)}', space=vmem, size = 0x12000, scoped, tag = 'internal scratch']
  %s0 = inlined_call_operand.vmem [shape: f32[2,16,512], index: 0, kind: input, shape index: {}]
  %s1 = inlined_call_operand.vmem [shape: bf16[32,144], index: 1, kind: input, shape index: {}]
  %s2 = inlined_call_operand.vmem [shape: bf16[16,144], index: 2, kind: input, shape index: {}]
  %s3 = inlined_call_operand.vmem [shape: f32[16,1], index: 3, kind: input, shape index: {}]
  %s4 = inlined_call_operand.vmem [shape: f32[16,1], index: 4, kind: input, shape index: {}]
  %s5 = inlined_call_operand.vmem [shape: f32[16,1], index: 5, kind: input, shape index: {}]
  %s6 = inlined_call_operand.vmem [shape: f32[8,512], index: 6, kind: input, shape index: {}]
  %s7 = inlined_call_operand.vmem [shape: f32[2,16,512], index: 7, kind: output, shape index: {}]
  %s8 = sld [smem:[#allocation0]]
  $region61: #{dead_preact_block.1} parent=0
    _
  %s10 = ssub.s32 1, %s8
  %s11 = scalar_select 0, %s10, %s8
  loop: start=0, step=1, limit=4
  $region2: #{dead_preact_block.1} parent=0 // loop_pre_header
    _
  $region3: #{dead_preact_block.1} parent=0 // loop_header
    %s13 = sphi 0, %s17
    %p14 = scmp.ge.s32.totalorder %s13, 4
    %s23 = sphi 0, %s25
    %s26 = sphi 0, %s23
    %s27 = sphi 0, %s26
    %s43 = sphi 0, %s27
    %s47 = sphi 0, %s47
    %s49 = sphi 0, %s47
    %s50 = sphi 0, %s49
    %s64 = sphi 0, %s50
    %s68 = sphi 0, %s68
    %s70 = sphi 0, %s68
    %s71 = sphi 0, %s70
    %s85 = sphi 0, %s71
    %s89 = sphi 0, %s89
    %s91 = sphi 0, %s89
    %s92 = sphi 0, %s91
    %s106 = sphi 0, %s92
    %s110 = sphi 0, %s110
    %s112 = sphi 0, %s110
    %s113 = sphi 0, %s112
    %s127 = sphi 0, %s113
    %s131 = sphi 0, %s131
    %s133 = sphi 0, %s131
    %s134 = sphi 0, %s133
    %s148 = sphi 0, %s134
    %s152 = sphi 0, %s152
    %s154 = sphi 0, %s152
    %s155 = sphi 0, %s154
    %s169 = sphi 0, %s155
    %s175 = sphi 0, %s177
    %s178 = sphi 0, %s175
    %s179 = sphi 0, %s178
    %s195 = sphi 0, %s179
  $region4: #{dead_preact_block.1} parent=0 // loop_header_branch
    %16 = sbr.rel (%p14) target = $region8
  $region5: #{dead_preact_block.1} parent=0 // loop_body
    %s18 = ssub.s32 %s13, 1
    %s19 = ssub.s32 %s13, 2
    %s20 = sadd.s32 %s13, 1
    %s21 = ssub.s32 %s13, %s20
    %p22 = scmp.eq.s32.totalorder %s21, 0
    %s24 = sadd.s32 %s23, 1
    %s25 = scalar_select %p22, %s23, %s24
    %p28 = pneg %p22
    %p29 = scmp.eq.s32.totalorder %s13, 1
    %p30 = por %p28, %p29
    %p31 = scmp.ne.s32.totalorder %s23, %s26
    %p32 = scmp.eq.s32.totalorder %s13, 0
    %p33 = por %p31, %p32
    %p34 = scmp.ne.s32.totalorder %s23, %s26
    %p35 = scmp.eq.s32.totalorder %s18, 1
    %p36 = por %p34, %p35
    %p37 = scmp.ne.s32.totalorder %s26, %s27
    %p38 = scmp.eq.s32.totalorder %s18, 0
    %p39 = por %p37, %p38
    %p40 = scmp.ne.s32.totalorder %s26, %s27
    %p41 = scmp.eq.s32.totalorder %s19, 1
    %p42 = por %p40, %p41
    %p44 = scmp.ne.s32.totalorder %s27, %s43
    %p45 = scmp.eq.s32.totalorder %s19, 0
    %p46 = por %p44, %p45
    %s48 = sadd.s32 %s47, 1
    %p51 = scmp.eq.s32.totalorder %s13, 1
    %p52 = scmp.ne.s32.totalorder %s47, %s49
    %p53 = scmp.eq.s32.totalorder %s13, 0
    %p54 = por %p52, %p53
    %p55 = scmp.ne.s32.totalorder %s47, %s49
    %p56 = scmp.eq.s32.totalorder %s18, 1
    %p57 = por %p55, %p56
    %p58 = scmp.ne.s32.totalorder %s49, %s50
    %p59 = scmp.eq.s32.totalorder %s18, 0
    %p60 = por %p58, %p59
    %p61 = scmp.ne.s32.totalorder %s49, %s50
    %p62 = scmp.eq.s32.totalorder %s19, 1
    %p63 = por %p61, %p62
    %p65 = scmp.ne.s32.totalorder %s50, %s64
    %p66 = scmp.eq.s32.totalorder %s19, 0
    %p67 = por %p65, %p66
    %s69 = sadd.s32 %s68, 1
    %p72 = scmp.eq.s32.totalorder %s13, 1
    %p73 = scmp.ne.s32.totalorder %s68, %s70
    %p74 = scmp.eq.s32.totalorder %s13, 0
    %p75 = por %p73, %p74
    %p76 = scmp.ne.s32.totalorder %s68, %s70
    %p77 = scmp.eq.s32.totalorder %s18, 1
    %p78 = por %p76, %p77
    %p79 = scmp.ne.s32.totalorder %s70, %s71
    %p80 = scmp.eq.s32.totalorder %s18, 0
    %p81 = por %p79, %p80
    %p82 = scmp.ne.s32.totalorder %s70, %s71
    %p83 = scmp.eq.s32.totalorder %s19, 1
    %p84 = por %p82, %p83
    %p86 = scmp.ne.s32.totalorder %s71, %s85
    %p87 = scmp.eq.s32.totalorder %s19, 0
    %p88 = por %p86, %p87
    %s90 = sadd.s32 %s89, 1
    %p93 = scmp.eq.s32.totalorder %s13, 1
    %p94 = scmp.ne.s32.totalorder %s89, %s91
    %p95 = scmp.eq.s32.totalorder %s13, 0
    %p96 = por %p94, %p95
    %p97 = scmp.ne.s32.totalorder %s89, %s91
    %p98 = scmp.eq.s32.totalorder %s18, 1
    %p99 = por %p97, %p98
    %p100 = scmp.ne.s32.totalorder %s91, %s92
    %p101 = scmp.eq.s32.totalorder %s18, 0
    %p102 = por %p100, %p101
    %p103 = scmp.ne.s32.totalorder %s91, %s92
    %p104 = scmp.eq.s32.totalorder %s19, 1
    %p105 = por %p103, %p104
    %p107 = scmp.ne.s32.totalorder %s92, %s106
    %p108 = scmp.eq.s32.totalorder %s19, 0
    %p109 = por %p107, %p108
    %s111 = sadd.s32 %s110, 1
    %p114 = scmp.eq.s32.totalorder %s13, 1
    %p115 = scmp.ne.s32.totalorder %s110, %s112
    %p116 = scmp.eq.s32.totalorder %s13, 0
    %p117 = por %p115, %p116
    %p118 = scmp.ne.s32.totalorder %s110, %s112
    %p119 = scmp.eq.s32.totalorder %s18, 1
    %p120 = por %p118, %p119
    %p121 = scmp.ne.s32.totalorder %s112, %s113
    %p122 = scmp.eq.s32.totalorder %s18, 0
    %p123 = por %p121, %p122
    %p124 = scmp.ne.s32.totalorder %s112, %s113
    %p125 = scmp.eq.s32.totalorder %s19, 1
    %p126 = por %p124, %p125
    %p128 = scmp.ne.s32.totalorder %s113, %s127
    %p129 = scmp.eq.s32.totalorder %s19, 0
    %p130 = por %p128, %p129
    %s132 = sadd.s32 %s131, 1
    %p135 = scmp.eq.s32.totalorder %s13, 1
    %p136 = scmp.ne.s32.totalorder %s131, %s133
    %p137 = scmp.eq.s32.totalorder %s13, 0
    %p138 = por %p136, %p137
    %p139 = scmp.ne.s32.totalorder %s131, %s133
    %p140 = scmp.eq.s32.totalorder %s18, 1
    %p141 = por %p139, %p140
    %p142 = scmp.ne.s32.totalorder %s133, %s134
    %p143 = scmp.eq.s32.totalorder %s18, 0
    %p144 = por %p142, %p143
    %p145 = scmp.ne.s32.totalorder %s133, %s134
    %p146 = scmp.eq.s32.totalorder %s19, 1
    %p147 = por %p145, %p146
    %p149 = scmp.ne.s32.totalorder %s134, %s148
    %p150 = scmp.eq.s32.totalorder %s19, 0
    %p151 = por %p149, %p150
    %s153 = sadd.s32 %s152, 1
    %p156 = scmp.eq.s32.totalorder %s13, 1
    %p157 = scmp.ne.s32.totalorder %s152, %s154
    %p158 = scmp.eq.s32.totalorder %s13, 0
    %p159 = por %p157, %p158
    %p160 = scmp.ne.s32.totalorder %s152, %s154
    %p161 = scmp.eq.s32.totalorder %s18, 1
    %p162 = por %p160, %p161
    %p163 = scmp.ne.s32.totalorder %s154, %s155
    %p164 = scmp.eq.s32.totalorder %s18, 0
    %p165 = por %p163, %p164
    %p166 = scmp.ne.s32.totalorder %s154, %s155
    %p167 = scmp.eq.s32.totalorder %s19, 1
    %p168 = por %p166, %p167
    %p170 = scmp.ne.s32.totalorder %s155, %s169
    %p171 = scmp.eq.s32.totalorder %s19, 0
    %p172 = por %p170, %p171
    %s173 = ssub.s32 %s13, %s20
    %p174 = scmp.eq.s32.totalorder %s173, 0
    %s176 = sadd.s32 %s175, 1
    %s177 = scalar_select %p174, %s175, %s176
    %p180 = pneg %p174
    %p181 = scmp.eq.s32.totalorder %s13, 1
    %p182 = por %p180, %p181
    %p183 = scmp.ne.s32.totalorder %s175, %s178
    %p184 = scmp.eq.s32.totalorder %s13, 0
    %p185 = por %p183, %p184
    %p186 = scmp.ne.s32.totalorder %s175, %s178
    %p187 = scmp.eq.s32.totalorder %s18, 1
    %p188 = por %p186, %p187
    %p189 = scmp.ne.s32.totalorder %s178, %s179
    %p190 = scmp.eq.s32.totalorder %s18, 0
    %p191 = por %p189, %p190
    %p192 = scmp.ne.s32.totalorder %s178, %s179
    %p193 = scmp.eq.s32.totalorder %s19, 1
    %p194 = por %p192, %p193
    %p196 = scmp.ne.s32.totalorder %s179, %s195
    %p197 = scmp.eq.s32.totalorder %s19, 0
    %p198 = por %p196, %p197
    %p199 = scmp.le.s32.totalorder 1, %s13
    %p200 = scmp.lt.s32.totalorder %s13, 3
    %p201 = pnand %p199, %p200
    %p202 = pneg %p201
    // Predicated region
    $region9: #{dead_preact_block.1} parent=5 // pred_check
      _
    $region10: #{dead_preact_block.1} parent=5 // pred_check_branch
      %204 = sbr.rel (%p201) target = $region12
    $region11: #{dead_preact_block.1} parent=5 // pred_region
      %s205 = ssub.s32 %s13, 1
      // Predicated region
      $region13: #{dead_preact_block.1} parent=11 // pred_check
        %p206 = pneg %p60
      $region14: #{dead_preact_block.1} parent=11 // pred_check_branch
        %208 = sbr.rel (%p206) target = $region16
      $region15: #{dead_preact_block.1} parent=11 // pred_region
        _
      $region16: #{dead_preact_block.1} parent=11 // pred_fallthru
        _
      // Predicated region
      $region17: #{dead_preact_block.1} parent=11 // pred_check
        %p209 = pneg %p81
      $region18: #{dead_preact_block.1} parent=11 // pred_check_branch
        %211 = sbr.rel (%p209) target = $region20
      $region19: #{dead_preact_block.1} parent=11 // pred_region
        _
      $region20: #{dead_preact_block.1} parent=11 // pred_fallthru
        _
      // Predicated region
      $region21: #{dead_preact_block.1} parent=11 // pred_check
        %p212 = pneg %p102
      $region22: #{dead_preact_block.1} parent=11 // pred_check_branch
        %214 = sbr.rel (%p212) target = $region24
      $region23: #{dead_preact_block.1} parent=11 // pred_region
        _
      $region24: #{dead_preact_block.1} parent=11 // pred_fallthru
        _
      // Predicated region
      $region25: #{dead_preact_block.1} parent=11 // pred_check
        %p215 = pneg %p123
      $region26: #{dead_preact_block.1} parent=11 // pred_check_branch
        %217 = sbr.rel (%p215) target = $region28
      $region27: #{dead_preact_block.1} parent=11 // pred_region
        _
      $region28: #{dead_preact_block.1} parent=11 // pred_fallthru
        _
      // Predicated region
      $region29: #{dead_preact_block.1} parent=11 // pred_check
        %p218 = pneg %p144
      $region30: #{dead_preact_block.1} parent=11 // pred_check_branch
        %220 = sbr.rel (%p218) target = $region32
      $region31: #{dead_preact_block.1} parent=11 // pred_region
        _
      $region32: #{dead_preact_block.1} parent=11 // pred_fallthru
        _
      // Predicated region
      $region33: #{dead_preact_block.1} parent=11 // pred_check
        %p221 = pneg %p165
      $region34: #{dead_preact_block.1} parent=11 // pred_check_branch
        %223 = sbr.rel (%p221) target = $region36
      $region35: #{dead_preact_block.1} parent=11 // pred_region
        _
      $region36: #{dead_preact_block.1} parent=11 // pred_fallthru
        _
    $region12: #{dead_preact_block.1} parent=5 // pred_fallthru
      _
    %p224 = scmp.lt.s32.totalorder %s13, 2
    // Predicated region
    $region37: #{dead_preact_block.1} parent=5 // pred_check
      %p225 = pneg %p224
    $region38: #{dead_preact_block.1} parent=5 // pred_check_branch
      %227 = sbr.rel (%p225) target = $region40
    $region39: #{dead_preact_block.1} parent=5 // pred_region
      // Predicated region
      $region41: #{dead_preact_block.1} parent=39 // pred_check
        %p228 = pneg %p33
      $region42: #{dead_preact_block.1} parent=39 // pred_check_branch
        %230 = sbr.rel (%p228) target = $region44
      $region43: #{dead_preact_block.1} parent=39 // pred_region
        %p231 = scmp.lt.s32.totalorder %s13, 1
        %s232 = scalar_select %p231, %s13, 1
        %s233 = smul.addr %s232, 8
        %s234 = smul.addr %s233, 8
        %s235 = scalar_lea.vmem %s0, %s234
      $region44: #{dead_preact_block.1} parent=39 // pred_fallthru
        _
    $region40: #{dead_preact_block.1} parent=5 // pred_fallthru
      _
    %p236 = scmp.le.s32.totalorder 1, %s13
    %p237 = scmp.lt.s32.totalorder %s13, 3
    %p238 = pnand %p236, %p237
    %p239 = pneg %p238
    // Predicated region
    $region45: #{dead_preact_block.1} parent=5 // pred_check
      _
    $region46: #{dead_preact_block.1} parent=5 // pred_check_branch
      %241 = sbr.rel (%p238) target = $region48
    $region47: #{dead_preact_block.1} parent=5 // pred_region
      %s242 = ssub.s32 %s13, 1
      %p243 = scmp.lt.s32.totalorder %s18, 1
      %s244 = scalar_select %p243, %s18, 1
      %s245 = smul.addr %s244, 8
      %s246 = smul.addr %s245, 8
      %s247 = scalar_lea.vmem %s0, %s246
      %p248 = pneg %p39
      %p249 = pneg %p36
      %p250 = pneg %p60
      %p251 = pneg %p57
      %p252 = pneg %p81
      %p253 = pneg %p78
      %p254 = pneg %p102
      %p255 = pneg %p99
      %p256 = pneg %p123
      %p257 = pneg %p120
      %p258 = pneg %p144
      %p259 = pneg %p141
      %p260 = pneg %p165
      %p261 = pneg %p162
      %p262 = pneg %p191
      %p263 = pneg %p188
      %p264 = scmp.lt.s32.totalorder %s18, 1
      %s265 = scalar_select %p264, %s18, 1
      %s266 = smul.addr %s265, 8
      %s267 = smul.addr %s266, 8
      %s268 = scalar_lea.vmem %s7, %s267
      %p269 = scmp.lt.s32.totalorder %s18, 1
      %s270 = scalar_select %p269, %s18, 1
      %s271 = smul.addr %s270, 8
      %s272 = smul.addr %s271, 8
      %s273 = scalar_lea.vmem %s0, %s272
      %p274 = scmp.lt.s32.totalorder %s18, 1
      %s275 = scalar_select %p274, %s18, 1
      %s276 = smul.addr %s275, 8
      %s277 = smul.addr %s276, 8
      %s278 = scalar_lea.vmem %s7, %s277
      %v280 = vld [vmem:[%s273] sm:$0xff]
      %v281 = vld [vmem:[%s273 + $0x8] sm:$0xff]
      %v282 = vld [vmem:[%s273 + $0x10] sm:$0xff]
      %v283 = vld [vmem:[%s273 + $0x18] sm:$0xff]
      %v284 = vld [vmem:[%s273 + $0x20] sm:$0xff]
      %v285 = vld [vmem:[%s273 + $0x28] sm:$0xff]
      %v286 = vld [vmem:[%s273 + $0x30] sm:$0xff]
      %v287 = vld [vmem:[%s273 + $0x38] sm:$0xff]
      %v288 = vld [vmem:[%s6] sm:$0xff]
      %v289 = vld [vmem:[%s6 + $0x8] sm:$0xff]
      %v290 = vld [vmem:[%s6 + $0x10] sm:$0xff]
      %v291 = vld [vmem:[%s6 + $0x18] sm:$0xff]
      %v292 = vld [vmem:[%s3] sm:$0xff]
      %v293 = vld [vmem:[%s3 + $0x8] sm:$0xff]
      %295 = vset.pattern.permute.xlu0 0
      %296 = vperm.xlu0 %295, %v292
      %v297 = vpop.permute.xlu0 %296
      %300 = vset.pattern.permute.xlu0 0
      %301 = vperm.xlu0 %300, %v293
      %v302 = vpop.permute.xlu0 %301
      %v304 = vmul.f32 %v280, %v297
      %v305 = vmul.f32 %v281, %v297
      %v306 = vmul.f32 %v282, %v297
      %v307 = vmul.f32 %v283, %v297
      %v308 = vmul.f32 %v284, %v302
      %v309 = vmul.f32 %v285, %v302
      %v310 = vmul.f32 %v286, %v302
      %v311 = vmul.f32 %v287, %v302
      %v312 = vld [vmem:[%s4] sm:$0xff]
      %v313 = vld [vmem:[%s4 + $0x8] sm:$0xff]
      %315 = vset.pattern.permute.xlu0 0
      %316 = vperm.xlu0 %315, %v312
      %v317 = vpop.permute.xlu0 %316
      %320 = vset.pattern.permute.xlu0 0
      %321 = vperm.xlu0 %320, %v313
      %v322 = vpop.permute.xlu0 %321
      %v324 = vadd.f32 %v304, %v317
      %v325 = vadd.f32 %v305, %v317
      %v326 = vadd.f32 %v306, %v317
      %v327 = vadd.f32 %v307, %v317
      %v328 = vadd.f32 %v308, %v322
      %v329 = vadd.f32 %v309, %v322
      %v330 = vadd.f32 %v310, %v322
      %v331 = vadd.f32 %v311, %v322
      %v332 = vmax.f32 %v324, 0.0
      %v333 = vmax.f32 %v325, 0.0
      %v334 = vmax.f32 %v326, 0.0
      %v335 = vmax.f32 %v327, 0.0
      %v336 = vmax.f32 %v328, 0.0
      %v337 = vmax.f32 %v329, 0.0
      %v338 = vmax.f32 %v330, 0.0
      %v339 = vmax.f32 %v331, 0.0
      %340 = vrot.lane.b32.xlu0 %v332, 17
      %v341 = vpop.permute.xlu0 %340
      %342 = vrot.lane.b32.xlu0 %v336, 17
      %v343 = vpop.permute.xlu0 %342
      %344 = vrot.lane.b32.xlu0 %v333, 17
      %v345 = vpop.permute.xlu0 %344
      %346 = vrot.lane.b32.xlu0 %v337, 17
      %v347 = vpop.permute.xlu0 %346
      %348 = vrot.lane.b32.xlu0 %v334, 17
      %v349 = vpop.permute.xlu0 %348
      %350 = vrot.lane.b32.xlu0 %v338, 17
      %v351 = vpop.permute.xlu0 %350
      %352 = vrot.lane.b32.xlu0 %v335, 17
      %v353 = vpop.permute.xlu0 %352
      %354 = vrot.lane.b32.xlu0 %v339, 17
      %v355 = vpop.permute.xlu0 %354
      %v356 = vlaneseq
      %v357 = vand.u32 %v356, 127
      %vm358 = vcmp.lt.s32.totalorder %v357, 17
      %v359 = vsel %vm358, %v349, %v353
      %v360 = vsel %vm358, %v351, %v355
      %v361 = vsel %vm358, %v345, %v349
      %v362 = vsel %vm358, %v347, %v351
      %v363 = vsel %vm358, %v341, %v345
      %v364 = vsel %vm358, %v343, %v347
      %v365 = vsel %vm358, %v353, %v341
      %v366 = vsel %vm358, %v355, %v343
      %v367 = vlaneseq
      %v368 = vshrl.u32 %v367, 7
      %v369 = vsub.s32 0, %v368
      %v370 = vrot.slane %v288, %v369
      %v371 = vlaneseq
      %v372 = vshrl.u32 %v371, 7
      %v373 = vsub.s32 0, %v372
      %v374 = vrot.slane %v289, %v373
      %v375 = vlaneseq
      %v376 = vshrl.u32 %v375, 7
      %v377 = vsub.s32 0, %v376
      %v378 = vrot.slane %v290, %v377
      %v379 = vlaneseq
      %v380 = vshrl.u32 %v379, 7
      %v381 = vsub.s32 0, %v380
      %v382 = vrot.slane %v291, %v381
      %v383 = vmul.f32 %v365, %v370
      %v384 = vmul.f32 %v363, %v374
      %v385 = vmul.f32 %v361, %v378
      %v386 = vmul.f32 %v359, %v382
      %v387 = vmul.f32 %v366, %v370
      %v388 = vmul.f32 %v364, %v374
      %v389 = vmul.f32 %v362, %v378
      %v390 = vmul.f32 %v360, %v382
      %v391 = vpack.c.bf16 %v387, %v383
      %v392 = vpack.c.bf16 %v388, %v384
      %v393 = vpack.c.bf16 %v389, %v385
      %v394 = vpack.c.bf16 %v390, %v386
      %395 = vrot.lane.b32.xlu0 %v332, 16
      %v396 = vpop.permute.xlu0 %395
      %397 = vrot.lane.b32.xlu0 %v336, 16
      %v398 = vpop.permute.xlu0 %397
      %399 = vrot.lane.b32.xlu0 %v333, 16
      %v400 = vpop.permute.xlu0 %399
      %401 = vrot.lane.b32.xlu0 %v337, 16
      %v402 = vpop.permute.xlu0 %401
      %403 = vrot.lane.b32.xlu0 %v334, 16
      %v404 = vpop.permute.xlu0 %403
      %405 = vrot.lane.b32.xlu0 %v338, 16
      %v406 = vpop.permute.xlu0 %405
      %407 = vrot.lane.b32.xlu0 %v335, 16
      %v408 = vpop.permute.xlu0 %407
      %409 = vrot.lane.b32.xlu0 %v339, 16
      %v410 = vpop.permute.xlu0 %409
      %vm411 = vcmp.lt.s32.totalorder %v357, 16
      %v412 = vsel %vm411, %v404, %v408
      %v413 = vsel %vm411, %v406, %v410
      %v414 = vsel %vm411, %v400, %v404
      %v415 = vsel %vm411, %v402, %v406
      %v416 = vsel %vm411, %v396, %v400
      %v417 = vsel %vm411, %v398, %v402
      %v418 = vsel %vm411, %v408, %v396
      %v419 = vsel %vm411, %v410, %v398
      %v420 = vlaneseq
      %v421 = vshrl.u32 %v420, 7
      %v422 = vsub.s32 1, %v421
      %v423 = vrot.slane %v288, %v422
      %v424 = vlaneseq
      %v425 = vshrl.u32 %v424, 7
      %v426 = vsub.s32 1, %v425
      %v427 = vrot.slane %v289, %v426
      %v428 = vlaneseq
      %v429 = vshrl.u32 %v428, 7
      %v430 = vsub.s32 1, %v429
      %v431 = vrot.slane %v290, %v430
      %v432 = vlaneseq
      %v433 = vshrl.u32 %v432, 7
      %v434 = vsub.s32 1, %v433
      %v435 = vrot.slane %v291, %v434
      %v436 = vmul.f32 %v418, %v423
      %v437 = vmul.f32 %v416, %v427
      %v438 = vmul.f32 %v414, %v431
      %v439 = vmul.f32 %v412, %v435
      %v440 = vmul.f32 %v419, %v423
      %v441 = vmul.f32 %v417, %v427
      %v442 = vmul.f32 %v415, %v431
      %v443 = vmul.f32 %v413, %v435
      %v444 = vpack.c.bf16 %v440, %v436
      %v445 = vpack.c.bf16 %v441, %v437
      %v446 = vpack.c.bf16 %v442, %v438
      %v447 = vpack.c.bf16 %v443, %v439
      %448 = vrot.lane.b32.xlu0 %v332, 15
      %v449 = vpop.permute.xlu0 %448
      %450 = vrot.lane.b32.xlu0 %v336, 15
      %v451 = vpop.permute.xlu0 %450
      %452 = vrot.lane.b32.xlu0 %v333, 15
      %v453 = vpop.permute.xlu0 %452
      %454 = vrot.lane.b32.xlu0 %v337, 15
      %v455 = vpop.permute.xlu0 %454
      %456 = vrot.lane.b32.xlu0 %v334, 15
      %v457 = vpop.permute.xlu0 %456
      %458 = vrot.lane.b32.xlu0 %v338, 15
      %v459 = vpop.permute.xlu0 %458
      %460 = vrot.lane.b32.xlu0 %v335, 15
      %v461 = vpop.permute.xlu0 %460
      %462 = vrot.lane.b32.xlu0 %v339, 15
      %v463 = vpop.permute.xlu0 %462
      %vm464 = vcmp.lt.s32.totalorder %v357, 15
      %v465 = vsel %vm464, %v457, %v461
      %v466 = vsel %vm464, %v459, %v463
      %v467 = vsel %vm464, %v453, %v457
      %v468 = vsel %vm464, %v455, %v459
      %v469 = vsel %vm464, %v449, %v453
      %v470 = vsel %vm464, %v451, %v455
      %v471 = vsel %vm464, %v461, %v449
      %v472 = vsel %vm464, %v463, %v451
      %v473 = vlaneseq
      %v474 = vshrl.u32 %v473, 7
      %v475 = vsub.s32 2, %v474
      %v476 = vrot.slane %v288, %v475
      %v477 = vlaneseq
      %v478 = vshrl.u32 %v477, 7
      %v479 = vsub.s32 2, %v478
      %v480 = vrot.slane %v289, %v479
      %v481 = vlaneseq
      %v482 = vshrl.u32 %v481, 7
      %v483 = vsub.s32 2, %v482
      %v484 = vrot.slane %v290, %v483
      %v485 = vlaneseq
      %v486 = vshrl.u32 %v485, 7
      %v487 = vsub.s32 2, %v486
      %v488 = vrot.slane %v291, %v487
      %v489 = vmul.f32 %v471, %v476
      %v490 = vmul.f32 %v469, %v480
      %v491 = vmul.f32 %v467, %v484
      %v492 = vmul.f32 %v465, %v488
      %v493 = vmul.f32 %v472, %v476
      %v494 = vmul.f32 %v470, %v480
      %v495 = vmul.f32 %v468, %v484
      %v496 = vmul.f32 %v466, %v488
      %v497 = vpack.c.bf16 %v493, %v489
      %v498 = vpack.c.bf16 %v494, %v490
      %v499 = vpack.c.bf16 %v495, %v491
      %v500 = vpack.c.bf16 %v496, %v492
      %501 = vrot.lane.b32.xlu0 %v332, 1
      %v502 = vpop.permute.xlu0 %501
      %503 = vrot.lane.b32.xlu0 %v336, 1
      %v504 = vpop.permute.xlu0 %503
      %505 = vrot.lane.b32.xlu0 %v333, 1
      %v506 = vpop.permute.xlu0 %505
      %507 = vrot.lane.b32.xlu0 %v337, 1
      %v508 = vpop.permute.xlu0 %507
      %509 = vrot.lane.b32.xlu0 %v334, 1
      %v510 = vpop.permute.xlu0 %509
      %511 = vrot.lane.b32.xlu0 %v338, 1
      %v512 = vpop.permute.xlu0 %511
      %513 = vrot.lane.b32.xlu0 %v335, 1
      %v514 = vpop.permute.xlu0 %513
      %515 = vrot.lane.b32.xlu0 %v339, 1
      %v516 = vpop.permute.xlu0 %515
      %vm517 = vcmp.lt.s32.totalorder %v357, 1
      %v518 = vsel %vm517, %v510, %v514
      %v519 = vsel %vm517, %v512, %v516
      %v520 = vsel %vm517, %v506, %v510
      %v521 = vsel %vm517, %v508, %v512
      %v522 = vsel %vm517, %v502, %v506
      %v523 = vsel %vm517, %v504, %v508
      %v524 = vsel %vm517, %v514, %v502
      %v525 = vsel %vm517, %v516, %v504
      %v526 = vlaneseq
      %v527 = vshrl.u32 %v526, 7
      %v528 = vsub.s32 3, %v527
      %v529 = vrot.slane %v288, %v528
      %v530 = vlaneseq
      %v531 = vshrl.u32 %v530, 7
      %v532 = vsub.s32 3, %v531
      %v533 = vrot.slane %v289, %v532
      %v534 = vlaneseq
      %v535 = vshrl.u32 %v534, 7
      %v536 = vsub.s32 3, %v535
      %v537 = vrot.slane %v290, %v536
      %v538 = vlaneseq
      %v539 = vshrl.u32 %v538, 7
      %v540 = vsub.s32 3, %v539
      %v541 = vrot.slane %v291, %v540
      %v542 = vmul.f32 %v524, %v529
      %v543 = vmul.f32 %v522, %v533
      %v544 = vmul.f32 %v520, %v537
      %v545 = vmul.f32 %v518, %v541
      %v546 = vmul.f32 %v525, %v529
      %v547 = vmul.f32 %v523, %v533
      %v548 = vmul.f32 %v521, %v537
      %v549 = vmul.f32 %v519, %v541
      %v550 = vpack.c.bf16 %v546, %v542
      %v551 = vpack.c.bf16 %v547, %v543
      %v552 = vpack.c.bf16 %v548, %v544
      %v553 = vpack.c.bf16 %v549, %v545
      %v554 = vpack.c.bf16 %v336, %v332
      %v555 = vpack.c.bf16 %v337, %v333
      %v556 = vpack.c.bf16 %v338, %v334
      %v557 = vpack.c.bf16 %v339, %v335
      %558 = vrot.lane.b32.xlu0 %v332, 127
      %v559 = vpop.permute.xlu0 %558
      %560 = vrot.lane.b32.xlu0 %v336, 127
      %v561 = vpop.permute.xlu0 %560
      %562 = vrot.lane.b32.xlu0 %v333, 127
      %v563 = vpop.permute.xlu0 %562
      %564 = vrot.lane.b32.xlu0 %v337, 127
      %v565 = vpop.permute.xlu0 %564
      %566 = vrot.lane.b32.xlu0 %v334, 127
      %v567 = vpop.permute.xlu0 %566
      %568 = vrot.lane.b32.xlu0 %v338, 127
      %v569 = vpop.permute.xlu0 %568
      %570 = vrot.lane.b32.xlu0 %v335, 127
      %v571 = vpop.permute.xlu0 %570
      %572 = vrot.lane.b32.xlu0 %v339, 127
      %v573 = vpop.permute.xlu0 %572
      %vm574 = vcmp.lt.s32.totalorder %v357, 127
      %v575 = vsel %vm574, %v567, %v571
      %v576 = vsel %vm574, %v569, %v573
      %v577 = vsel %vm574, %v563, %v567
      %v578 = vsel %vm574, %v565, %v569
      %v579 = vsel %vm574, %v559, %v563
      %v580 = vsel %vm574, %v561, %v565
      %v581 = vsel %vm574, %v571, %v559
      %v582 = vsel %vm574, %v573, %v561
      %v583 = vlaneseq
      %v584 = vshrl.u32 %v583, 7
      %v585 = vsub.s32 4, %v584
      %v586 = vrot.slane %v288, %v585
      %v587 = vlaneseq
      %v588 = vshrl.u32 %v587, 7
      %v589 = vsub.s32 4, %v588
      %v590 = vrot.slane %v289, %v589
      %v591 = vlaneseq
      %v592 = vshrl.u32 %v591, 7
      %v593 = vsub.s32 4, %v592
      %v594 = vrot.slane %v290, %v593
      %v595 = vlaneseq
      %v596 = vshrl.u32 %v595, 7
      %v597 = vsub.s32 4, %v596
      %v598 = vrot.slane %v291, %v597
      %v599 = vmul.f32 %v579, %v586
      %v600 = vmul.f32 %v577, %v590
      %v601 = vmul.f32 %v575, %v594
      %v602 = vmul.f32 %v581, %v598
      %v603 = vmul.f32 %v580, %v586
      %v604 = vmul.f32 %v578, %v590
      %v605 = vmul.f32 %v576, %v594
      %v606 = vmul.f32 %v582, %v598
      %v607 = vpack.c.bf16 %v603, %v599
      %v608 = vpack.c.bf16 %v604, %v600
      %v609 = vpack.c.bf16 %v605, %v601
      %v610 = vpack.c.bf16 %v606, %v602
      %611 = vrot.lane.b32.xlu0 %v332, 113
      %v612 = vpop.permute.xlu0 %611
      %613 = vrot.lane.b32.xlu0 %v336, 113
      %v614 = vpop.permute.xlu0 %613
      %615 = vrot.lane.b32.xlu0 %v333, 113
      %v616 = vpop.permute.xlu0 %615
      %617 = vrot.lane.b32.xlu0 %v337, 113
      %v618 = vpop.permute.xlu0 %617
      %619 = vrot.lane.b32.xlu0 %v334, 113
      %v620 = vpop.permute.xlu0 %619
      %621 = vrot.lane.b32.xlu0 %v338, 113
      %v622 = vpop.permute.xlu0 %621
      %623 = vrot.lane.b32.xlu0 %v335, 113
      %v624 = vpop.permute.xlu0 %623
      %625 = vrot.lane.b32.xlu0 %v339, 113
      %v626 = vpop.permute.xlu0 %625
      %vm627 = vcmp.lt.s32.totalorder %v357, 113
      %v628 = vsel %vm627, %v620, %v624
      %v629 = vsel %vm627, %v622, %v626
      %v630 = vsel %vm627, %v616, %v620
      %v631 = vsel %vm627, %v618, %v622
      %v632 = vsel %vm627, %v612, %v616
      %v633 = vsel %vm627, %v614, %v618
      %v634 = vsel %vm627, %v624, %v612
      %v635 = vsel %vm627, %v626, %v614
      %v636 = vlaneseq
      %v637 = vshrl.u32 %v636, 7
      %v638 = vsub.s32 5, %v637
      %v639 = vrot.slane %v288, %v638
      %v640 = vlaneseq
      %v641 = vshrl.u32 %v640, 7
      %v642 = vsub.s32 5, %v641
      %v643 = vrot.slane %v289, %v642
      %v644 = vlaneseq
      %v645 = vshrl.u32 %v644, 7
      %v646 = vsub.s32 5, %v645
      %v647 = vrot.slane %v290, %v646
      %v648 = vlaneseq
      %v649 = vshrl.u32 %v648, 7
      %v650 = vsub.s32 5, %v649
      %v651 = vrot.slane %v291, %v650
      %v652 = vmul.f32 %v632, %v639
      %v653 = vmul.f32 %v630, %v643
      %v654 = vmul.f32 %v628, %v647
      %v655 = vmul.f32 %v634, %v651
      %v656 = vmul.f32 %v633, %v639
      %v657 = vmul.f32 %v631, %v643
      %v658 = vmul.f32 %v629, %v647
      %v659 = vmul.f32 %v635, %v651
      %v660 = vpack.c.bf16 %v656, %v652
      %v661 = vpack.c.bf16 %v657, %v653
      %v662 = vpack.c.bf16 %v658, %v654
      %v663 = vpack.c.bf16 %v659, %v655
      %664 = vrot.lane.b32.xlu0 %v332, 112
      %v665 = vpop.permute.xlu0 %664
      %666 = vrot.lane.b32.xlu0 %v336, 112
      %v667 = vpop.permute.xlu0 %666
      %668 = vrot.lane.b32.xlu0 %v333, 112
      %v669 = vpop.permute.xlu0 %668
      %670 = vrot.lane.b32.xlu0 %v337, 112
      %v671 = vpop.permute.xlu0 %670
      %672 = vrot.lane.b32.xlu0 %v334, 112
      %v673 = vpop.permute.xlu0 %672
      %674 = vrot.lane.b32.xlu0 %v338, 112
      %v675 = vpop.permute.xlu0 %674
      %676 = vrot.lane.b32.xlu0 %v335, 112
      %v677 = vpop.permute.xlu0 %676
      %678 = vrot.lane.b32.xlu0 %v339, 112
      %v679 = vpop.permute.xlu0 %678
      %vm680 = vcmp.lt.s32.totalorder %v357, 112
      %v681 = vsel %vm680, %v673, %v677
      %v682 = vsel %vm680, %v675, %v679
      %v683 = vsel %vm680, %v669, %v673
      %v684 = vsel %vm680, %v671, %v675
      %v685 = vsel %vm680, %v665, %v669
      %v686 = vsel %vm680, %v667, %v671
      %v687 = vsel %vm680, %v677, %v665
      %v688 = vsel %vm680, %v679, %v667
      %v689 = vlaneseq
      %v690 = vshrl.u32 %v689, 7
      %v691 = vsub.s32 6, %v690
      %v692 = vrot.slane %v288, %v691
      %v693 = vlaneseq
      %v694 = vshrl.u32 %v693, 7
      %v695 = vsub.s32 6, %v694
      %v696 = vrot.slane %v289, %v695
      %v697 = vlaneseq
      %v698 = vshrl.u32 %v697, 7
      %v699 = vsub.s32 6, %v698
      %v700 = vrot.slane %v290, %v699
      %v701 = vlaneseq
      %v702 = vshrl.u32 %v701, 7
      %v703 = vsub.s32 6, %v702
      %v704 = vrot.slane %v291, %v703
      %v705 = vmul.f32 %v685, %v692
      %v706 = vmul.f32 %v683, %v696
      %v707 = vmul.f32 %v681, %v700
      %v708 = vmul.f32 %v687, %v704
      %v709 = vmul.f32 %v686, %v692
      %v710 = vmul.f32 %v684, %v696
      %v711 = vmul.f32 %v682, %v700
      %v712 = vmul.f32 %v688, %v704
      %v713 = vpack.c.bf16 %v709, %v705
      %v714 = vpack.c.bf16 %v710, %v706
      %v715 = vpack.c.bf16 %v711, %v707
      %v716 = vpack.c.bf16 %v712, %v708
      %717 = vrot.lane.b32.xlu0 %v332, 111
      %v718 = vpop.permute.xlu0 %717
      %719 = vrot.lane.b32.xlu0 %v336, 111
      %v720 = vpop.permute.xlu0 %719
      %721 = vrot.lane.b32.xlu0 %v333, 111
      %v722 = vpop.permute.xlu0 %721
      %723 = vrot.lane.b32.xlu0 %v337, 111
      %v724 = vpop.permute.xlu0 %723
      %725 = vrot.lane.b32.xlu0 %v334, 111
      %v726 = vpop.permute.xlu0 %725
      %727 = vrot.lane.b32.xlu0 %v338, 111
      %v728 = vpop.permute.xlu0 %727
      %729 = vrot.lane.b32.xlu0 %v335, 111
      %v730 = vpop.permute.xlu0 %729
      %731 = vrot.lane.b32.xlu0 %v339, 111
      %v732 = vpop.permute.xlu0 %731
      %vm733 = vcmp.lt.s32.totalorder %v357, 111
      %v734 = vsel %vm733, %v726, %v730
      %v735 = vsel %vm733, %v728, %v732
      %v736 = vsel %vm733, %v722, %v726
      %v737 = vsel %vm733, %v724, %v728
      %v738 = vsel %vm733, %v718, %v722
      %v739 = vsel %vm733, %v720, %v724
      %v740 = vsel %vm733, %v730, %v718
      %v741 = vsel %vm733, %v732, %v720
      %v742 = vlaneseq
      %v743 = vshrl.u32 %v742, 7
      %v744 = vsub.s32 7, %v743
      %v745 = vrot.slane %v288, %v744
      %v746 = vlaneseq
      %v747 = vshrl.u32 %v746, 7
      %v748 = vsub.s32 7, %v747
      %v749 = vrot.slane %v289, %v748
      %v750 = vlaneseq
      %v751 = vshrl.u32 %v750, 7
      %v752 = vsub.s32 7, %v751
      %v753 = vrot.slane %v290, %v752
      %v754 = vlaneseq
      %v755 = vshrl.u32 %v754, 7
      %v756 = vsub.s32 7, %v755
      %v757 = vrot.slane %v291, %v756
      %v758 = vmul.f32 %v738, %v745
      %v759 = vmul.f32 %v736, %v749
      %v760 = vmul.f32 %v734, %v753
      %v761 = vmul.f32 %v740, %v757
      %v762 = vmul.f32 %v739, %v745
      %v763 = vmul.f32 %v737, %v749
      %v764 = vmul.f32 %v735, %v753
      %v765 = vmul.f32 %v741, %v757
      %v766 = vpack.c.bf16 %v762, %v758
      %v767 = vpack.c.bf16 %v763, %v759
      %v768 = vpack.c.bf16 %v764, %v760
      %v769 = vpack.c.bf16 %v765, %v761
      %v770 = vld [vmem:[%s1] sm:$0xff]
      %v771 = vld [vmem:[%s1 + $0x8] sm:$0xff]
      %v772 = vld [vmem:[%s1 + $0x10] sm:$0xff]
      %v773 = vld [vmem:[%s1 + $0x18] sm:$0xff]
      %v778 = vunpack.c.l.b16 %v770
      %v779 = vunpack.c.h.b16 %v770
      %v780 = vunpack.c.l.b16 %v771
      %v781 = vunpack.c.h.b16 %v771
      %v782 = vunpack.c.l.b16 %v772
      %v783 = vunpack.c.h.b16 %v772
      %v784 = vunpack.c.l.b16 %v773
      %v785 = vunpack.c.h.b16 %v773
      %v786 = vpack.c.b16 %v780, %v778
      %v787 = vpack.c.b16 %v781, %v779
      %v788 = vpack.c.b16 %v784, %v782
      %v789 = vpack.c.b16 %v785, %v783
      %vm792 = vcmask 130048
      %v794 = vsel %vm792, %v787, 0
      %v797 = vsel %vm792, %v789, 0
      %799 = vmatprep.subr.bf16.mxu0 %v392
      %800 = vmatpush1.bf16.msra.mxu0 %v391
      %801 = vmatprep.subr.bf16.mxu0 %v445
      %802 = vmatpush1.bf16.msra.mxu0 %v444
      %803 = vmatprep.subr.bf16.mxu0 %v498
      %804 = vmatpush1.bf16.msra.mxu0 %v497
      %805 = vmatprep.subr.bf16.mxu0 %v551
      %806 = vmatpush1.bf16.msra.mxu0 %v550
      %807 = vmatprep.subr.bf16.mxu0 %v555
      %808 = vmatpush1.bf16.msra.mxu0 %v554
      %809 = vmatprep.subr.bf16.mxu0 %v608
      %810 = vmatpush1.bf16.msra.mxu0 %v607
      %811 = vmatprep.subr.bf16.mxu0 %v661
      %812 = vmatpush1.bf16.msra.mxu0 %v660
      %813 = vmatprep.subr.bf16.mxu0 %v714
      %814 = vmatpush1.bf16.msra.mxu0 %v713
      %815 = vmatprep.subr.bf16.mxu0 %v767
      %816 = vmatpush1.bf16.msra.mxu0 %v766
      %817 = vmatprep.subr.bf16.mxu0 0
      %818 = vmatpush1.bf16.msra.mxu0 0
      %819 = vmatprep.subr.bf16.mxu0 0
      %820 = vmatpush1.bf16.msra.mxu0 0
      %821 = vmatprep.subr.bf16.mxu0 0
      %822 = vmatpush1.bf16.msra.mxu0 0
      %823 = vmatprep.subr.bf16.mxu0 0
      %824 = vmatpush1.bf16.msra.mxu0 0
      %825 = vmatprep.subr.bf16.mxu0 0
      %826 = vmatpush1.bf16.msra.mxu0 0
      %827 = vmatprep.subr.bf16.mxu0 0
      %828 = vmatpush1.bf16.msra.mxu0 0
      %829 = vmatprep.subr.bf16.mxu0 0
      %830 = vmatpush1.bf16.msra.mxu0 0
      %831 = vmatprep.mubr.bf16.mxu0 %v794
      %832 = vmatmul.mubr.bf16.gmra.mrb[0].mxu0 %v786
      %v833 = vpop.f32.mrb[0].mxu0
      %v834 = vadd.f32 0.0, %v833
      %v835 = vpop.f32.mrb[0].mxu0
      %v836 = vadd.f32 0.0, %v835
      %v837 = vpop.f32.mrb[0].mxu0
      %v838 = vadd.f32 0.0, %v837
      %v839 = vpop.f32.mrb[0].mxu0
      %v840 = vadd.f32 0.0, %v839
      %841 = vmatprep.mubr.bf16.mxu0 %v797
      %842 = vmatmul.mubr.bf16.gmra.mrb[0].mxu0 %v788
      %v843 = vpop.f32.mrb[0].mxu0
      %v844 = vadd.f32 0.0, %v843
      %v845 = vpop.f32.mrb[0].mxu0
      %v846 = vadd.f32 0.0, %v845
      %v847 = vpop.f32.mrb[0].mxu0
      %v848 = vadd.f32 0.0, %v847
      %v849 = vpop.f32.mrb[0].mxu0
      %v850 = vadd.f32 0.0, %v849
      %851 = vdwg.mxu0
      %852 = vmatprep.subr.bf16.mxu0 %v394
      %853 = vmatpush1.bf16.msra.mxu0 %v393
      %854 = vmatprep.subr.bf16.mxu0 %v447
      %855 = vmatpush1.bf16.msra.mxu0 %v446
      %856 = vmatprep.subr.bf16.mxu0 %v500
      %857 = vmatpush1.bf16.msra.mxu0 %v499
      %858 = vmatprep.subr.bf16.mxu0 %v553
      %859 = vmatpush1.bf16.msra.mxu0 %v552
      %860 = vmatprep.subr.bf16.mxu0 %v557
      %861 = vmatpush1.bf16.msra.mxu0 %v556
      %862 = vmatprep.subr.bf16.mxu0 %v610
      %863 = vmatpush1.bf16.msra.mxu0 %v609
      %864 = vmatprep.subr.bf16.mxu0 %v663
      %865 = vmatpush1.bf16.msra.mxu0 %v662
      %866 = vmatprep.subr.bf16.mxu0 %v716
      %867 = vmatpush1.bf16.msra.mxu0 %v715
      %868 = vmatprep.subr.bf16.mxu0 %v769
      %869 = vmatpush1.bf16.msra.mxu0 %v768
      %870 = vmatprep.subr.bf16.mxu0 0
      %871 = vmatpush1.bf16.msra.mxu0 0
      %872 = vmatprep.subr.bf16.mxu0 0
      %873 = vmatpush1.bf16.msra.mxu0 0
      %874 = vmatprep.subr.bf16.mxu0 0
      %875 = vmatpush1.bf16.msra.mxu0 0
      %876 = vmatprep.subr.bf16.mxu0 0
      %877 = vmatpush1.bf16.msra.mxu0 0
      %878 = vmatprep.subr.bf16.mxu0 0
      %879 = vmatpush1.bf16.msra.mxu0 0
      %880 = vmatprep.subr.bf16.mxu0 0
      %881 = vmatpush1.bf16.msra.mxu0 0
      %882 = vmatprep.subr.bf16.mxu0 0
      %883 = vmatpush1.bf16.msra.mxu0 0
      %884 = vmatprep.mubr.bf16.mxu0 %v794
      %885 = vmatmul.mubr.bf16.gmra.mrb[0].mxu0 %v786
      %v886 = vpop.f32.mrb[0].mxu0
      %v887 = vadd.f32 0.0, %v886
      %v888 = vpop.f32.mrb[0].mxu0
      %v889 = vadd.f32 0.0, %v888
      %v890 = vpop.f32.mrb[0].mxu0
      %v891 = vadd.f32 0.0, %v890
      %v892 = vpop.f32.mrb[0].mxu0
      %v893 = vadd.f32 0.0, %v892
      %894 = vmatprep.mubr.bf16.mxu0 %v797
      %895 = vmatmul.mubr.bf16.gmra.mrb[0].mxu0 %v788
      %v896 = vpop.f32.mrb[0].mxu0
      %v897 = vadd.f32 0.0, %v896
      %v898 = vpop.f32.mrb[0].mxu0
      %v899 = vadd.f32 0.0, %v898
      %v900 = vpop.f32.mrb[0].mxu0
      %v901 = vadd.f32 0.0, %v900
      %v902 = vpop.f32.mrb[0].mxu0
      %v903 = vadd.f32 0.0, %v902
      %904 = vdwg.mxu0
      %v905 = vld [vmem:[%s5] sm:$0xff]
      %v906 = vld [vmem:[%s5 + $0x8] sm:$0xff]
      %908 = vset.pattern.permute.xlu0 0
      %909 = vperm.xlu0 %908, %v905
      %v910 = vpop.permute.xlu0 %909
      %913 = vset.pattern.permute.xlu0 0
      %914 = vperm.xlu0 %913, %v906
      %v915 = vpop.permute.xlu0 %914
      %v917 = vadd.f32 %v834, %v910
      %v918 = vadd.f32 %v836, %v910
      %v919 = vadd.f32 %v887, %v910
      %v920 = vadd.f32 %v889, %v910
      %v921 = vadd.f32 %v838, %v915
      %v922 = vadd.f32 %v840, %v915
      %v923 = vadd.f32 %v891, %v915
      %v924 = vadd.f32 %v893, %v915
      %v925 = vmax.f32 %v917, 0.0
      %v926 = vmax.f32 %v918, 0.0
      %v927 = vmax.f32 %v919, 0.0
      %v928 = vmax.f32 %v920, 0.0
      %v929 = vmax.f32 %v921, 0.0
      %v930 = vmax.f32 %v922, 0.0
      %v931 = vmax.f32 %v923, 0.0
      %v932 = vmax.f32 %v924, 0.0
      %933 = vrot.lane.b32.xlu0 %v925, 17
      %v934 = vpop.permute.xlu0 %933
      %935 = vrot.lane.b32.xlu0 %v929, 17
      %v936 = vpop.permute.xlu0 %935
      %937 = vrot.lane.b32.xlu0 %v926, 17
      %v938 = vpop.permute.xlu0 %937
      %939 = vrot.lane.b32.xlu0 %v930, 17
      %v940 = vpop.permute.xlu0 %939
      %941 = vrot.lane.b32.xlu0 %v927, 17
      %v942 = vpop.permute.xlu0 %941
      %943 = vrot.lane.b32.xlu0 %v931, 17
      %v944 = vpop.permute.xlu0 %943
      %945 = vrot.lane.b32.xlu0 %v928, 17
      %v946 = vpop.permute.xlu0 %945
      %947 = vrot.lane.b32.xlu0 %v932, 17
      %v948 = vpop.permute.xlu0 %947
      %v949 = vsel %vm358, %v942, %v946
      %v950 = vsel %vm358, %v944, %v948
      %v951 = vsel %vm358, %v938, %v942
      %v952 = vsel %vm358, %v940, %v944
      %v953 = vsel %vm358, %v934, %v938
      %v954 = vsel %vm358, %v936, %v940
      %v955 = vsel %vm358, %v946, %v934
      %v956 = vsel %vm358, %v948, %v936
      %v957 = vmul.f32 %v955, %v370
      %v958 = vmul.f32 %v953, %v374
      %v959 = vmul.f32 %v951, %v378
      %v960 = vmul.f32 %v949, %v382
      %v961 = vmul.f32 %v956, %v370
      %v962 = vmul.f32 %v954, %v374
      %v963 = vmul.f32 %v952, %v378
      %v964 = vmul.f32 %v950, %v382
      %v965 = vpack.c.bf16 %v961, %v957
      %v966 = vpack.c.bf16 %v962, %v958
      %v967 = vpack.c.bf16 %v963, %v959
      %v968 = vpack.c.bf16 %v964, %v960
      %969 = vrot.lane.b32.xlu0 %v925, 16
      %v970 = vpop.permute.xlu0 %969
      %971 = vrot.lane.b32.xlu0 %v929, 16
      %v972 = vpop.permute.xlu0 %971
      %973 = vrot.lane.b32.xlu0 %v926, 16
      %v974 = vpop.permute.xlu0 %973
      %975 = vrot.lane.b32.xlu0 %v930, 16
      %v976 = vpop.permute.xlu0 %975
      %977 = vrot.lane.b32.xlu0 %v927, 16
      %v978 = vpop.permute.xlu0 %977
      %979 = vrot.lane.b32.xlu0 %v931, 16
      %v980 = vpop.permute.xlu0 %979
      %981 = vrot.lane.b32.xlu0 %v928, 16
      %v982 = vpop.permute.xlu0 %981
      %983 = vrot.lane.b32.xlu0 %v932, 16
      %v984 = vpop.permute.xlu0 %983
      %v985 = vsel %vm411, %v978, %v982
      %v986 = vsel %vm411, %v980, %v984
      %v987 = vsel %vm411, %v974, %v978
      %v988 = vsel %vm411, %v976, %v980
      %v989 = vsel %vm411, %v970, %v974
      %v990 = vsel %vm411, %v972, %v976
      %v991 = vsel %vm411, %v982, %v970
      %v992 = vsel %vm411, %v984, %v972
      %v993 = vmul.f32 %v991, %v423
      %v994 = vmul.f32 %v989, %v427
      %v995 = vmul.f32 %v987, %v431
      %v996 = vmul.f32 %v985, %v435
      %v997 = vmul.f32 %v992, %v423
      %v998 = vmul.f32 %v990, %v427
      %v999 = vmul.f32 %v988, %v431
      %v1000 = vmul.f32 %v986, %v435
      %v1001 = vpack.c.bf16 %v997, %v993
      %v1002 = vpack.c.bf16 %v998, %v994
      %v1003 = vpack.c.bf16 %v999, %v995
      %v1004 = vpack.c.bf16 %v1000, %v996
      %1005 = vrot.lane.b32.xlu0 %v925, 15
      %v1006 = vpop.permute.xlu0 %1005
      %1007 = vrot.lane.b32.xlu0 %v929, 15
      %v1008 = vpop.permute.xlu0 %1007
      %1009 = vrot.lane.b32.xlu0 %v926, 15
      %v1010 = vpop.permute.xlu0 %1009
      %1011 = vrot.lane.b32.xlu0 %v930, 15
      %v1012 = vpop.permute.xlu0 %1011
      %1013 = vrot.lane.b32.xlu0 %v927, 15
      %v1014 = vpop.permute.xlu0 %1013
      %1015 = vrot.lane.b32.xlu0 %v931, 15
      %v1016 = vpop.permute.xlu0 %1015
      %1017 = vrot.lane.b32.xlu0 %v928, 15
      %v1018 = vpop.permute.xlu0 %1017
      %1019 = vrot.lane.b32.xlu0 %v932, 15
      %v1020 = vpop.permute.xlu0 %1019
      %v1021 = vsel %vm464, %v1014, %v1018
      %v1022 = vsel %vm464, %v1016, %v1020
      %v1023 = vsel %vm464, %v1010, %v1014
      %v1024 = vsel %vm464, %v1012, %v1016
      %v1025 = vsel %vm464, %v1006, %v1010
      %v1026 = vsel %vm464, %v1008, %v1012
      %v1027 = vsel %vm464, %v1018, %v1006
      %v1028 = vsel %vm464, %v1020, %v1008
      %v1029 = vmul.f32 %v1027, %v476
      %v1030 = vmul.f32 %v1025, %v480
      %v1031 = vmul.f32 %v1023, %v484
      %v1032 = vmul.f32 %v1021, %v488
      %v1033 = vmul.f32 %v1028, %v476
      %v1034 = vmul.f32 %v1026, %v480
      %v1035 = vmul.f32 %v1024, %v484
      %v1036 = vmul.f32 %v1022, %v488
      %v1037 = vpack.c.bf16 %v1033, %v1029
      %v1038 = vpack.c.bf16 %v1034, %v1030
      %v1039 = vpack.c.bf16 %v1035, %v1031
      %v1040 = vpack.c.bf16 %v1036, %v1032
      %1041 = vrot.lane.b32.xlu0 %v925, 1
      %v1042 = vpop.permute.xlu0 %1041
      %1043 = vrot.lane.b32.xlu0 %v929, 1
      %v1044 = vpop.permute.xlu0 %1043
      %1045 = vrot.lane.b32.xlu0 %v926, 1
      %v1046 = vpop.permute.xlu0 %1045
      %1047 = vrot.lane.b32.xlu0 %v930, 1
      %v1048 = vpop.permute.xlu0 %1047
      %1049 = vrot.lane.b32.xlu0 %v927, 1
      %v1050 = vpop.permute.xlu0 %1049
      %1051 = vrot.lane.b32.xlu0 %v931, 1
      %v1052 = vpop.permute.xlu0 %1051
      %1053 = vrot.lane.b32.xlu0 %v928, 1
      %v1054 = vpop.permute.xlu0 %1053
      %1055 = vrot.lane.b32.xlu0 %v932, 1
      %v1056 = vpop.permute.xlu0 %1055
      %v1057 = vsel %vm517, %v1050, %v1054
      %v1058 = vsel %vm517, %v1052, %v1056
      %v1059 = vsel %vm517, %v1046, %v1050
      %v1060 = vsel %vm517, %v1048, %v1052
      %v1061 = vsel %vm517, %v1042, %v1046
      %v1062 = vsel %vm517, %v1044, %v1048
      %v1063 = vsel %vm517, %v1054, %v1042
      %v1064 = vsel %vm517, %v1056, %v1044
      %v1065 = vmul.f32 %v1063, %v529
      %v1066 = vmul.f32 %v1061, %v533
      %v1067 = vmul.f32 %v1059, %v537
      %v1068 = vmul.f32 %v1057, %v541
      %v1069 = vmul.f32 %v1064, %v529
      %v1070 = vmul.f32 %v1062, %v533
      %v1071 = vmul.f32 %v1060, %v537
      %v1072 = vmul.f32 %v1058, %v541
      %v1073 = vpack.c.bf16 %v1069, %v1065
      %v1074 = vpack.c.bf16 %v1070, %v1066
      %v1075 = vpack.c.bf16 %v1071, %v1067
      %v1076 = vpack.c.bf16 %v1072, %v1068
      %v1077 = vpack.c.bf16 %v929, %v925
      %v1078 = vpack.c.bf16 %v930, %v926
      %v1079 = vpack.c.bf16 %v931, %v927
      %v1080 = vpack.c.bf16 %v932, %v928
      %1081 = vrot.lane.b32.xlu0 %v925, 127
      %v1082 = vpop.permute.xlu0 %1081
      %1083 = vrot.lane.b32.xlu0 %v929, 127
      %v1084 = vpop.permute.xlu0 %1083
      %1085 = vrot.lane.b32.xlu0 %v926, 127
      %v1086 = vpop.permute.xlu0 %1085
      %1087 = vrot.lane.b32.xlu0 %v930, 127
      %v1088 = vpop.permute.xlu0 %1087
      %1089 = vrot.lane.b32.xlu0 %v927, 127
      %v1090 = vpop.permute.xlu0 %1089
      %1091 = vrot.lane.b32.xlu0 %v931, 127
      %v1092 = vpop.permute.xlu0 %1091
      %1093 = vrot.lane.b32.xlu0 %v928, 127
      %v1094 = vpop.permute.xlu0 %1093
      %1095 = vrot.lane.b32.xlu0 %v932, 127
      %v1096 = vpop.permute.xlu0 %1095
      %v1097 = vsel %vm574, %v1090, %v1094
      %v1098 = vsel %vm574, %v1092, %v1096
      %v1099 = vsel %vm574, %v1086, %v1090
      %v1100 = vsel %vm574, %v1088, %v1092
      %v1101 = vsel %vm574, %v1082, %v1086
      %v1102 = vsel %vm574, %v1084, %v1088
      %v1103 = vsel %vm574, %v1094, %v1082
      %v1104 = vsel %vm574, %v1096, %v1084
      %v1105 = vmul.f32 %v1101, %v586
      %v1106 = vmul.f32 %v1099, %v590
      %v1107 = vmul.f32 %v1097, %v594
      %v1108 = vmul.f32 %v1103, %v598
      %v1109 = vmul.f32 %v1102, %v586
      %v1110 = vmul.f32 %v1100, %v590
      %v1111 = vmul.f32 %v1098, %v594
      %v1112 = vmul.f32 %v1104, %v598
      %v1113 = vpack.c.bf16 %v1109, %v1105
      %v1114 = vpack.c.bf16 %v1110, %v1106
      %v1115 = vpack.c.bf16 %v1111, %v1107
      %v1116 = vpack.c.bf16 %v1112, %v1108
      %1117 = vrot.lane.b32.xlu0 %v925, 113
      %v1118 = vpop.permute.xlu0 %1117
      %1119 = vrot.lane.b32.xlu0 %v929, 113
      %v1120 = vpop.permute.xlu0 %1119
      %1121 = vrot.lane.b32.xlu0 %v926, 113
      %v1122 = vpop.permute.xlu0 %1121
      %1123 = vrot.lane.b32.xlu0 %v930, 113
      %v1124 = vpop.permute.xlu0 %1123
      %1125 = vrot.lane.b32.xlu0 %v927, 113
      %v1126 = vpop.permute.xlu0 %1125
      %1127 = vrot.lane.b32.xlu0 %v931, 113
      %v1128 = vpop.permute.xlu0 %1127
      %1129 = vrot.lane.b32.xlu0 %v928, 113
      %v1130 = vpop.permute.xlu0 %1129
      %1131 = vrot.lane.b32.xlu0 %v932, 113
      %v1132 = vpop.permute.xlu0 %1131
      %v1133 = vsel %vm627, %v1126, %v1130
      %v1134 = vsel %vm627, %v1128, %v1132
      %v1135 = vsel %vm627, %v1122, %v1126
      %v1136 = vsel %vm627, %v1124, %v1128
      %v1137 = vsel %vm627, %v1118, %v1122
      %v1138 = vsel %vm627, %v1120, %v1124
      %v1139 = vsel %vm627, %v1130, %v1118
      %v1140 = vsel %vm627, %v1132, %v1120
      %v1141 = vmul.f32 %v1137, %v639
      %v1142 = vmul.f32 %v1135, %v643
      %v1143 = vmul.f32 %v1133, %v647
      %v1144 = vmul.f32 %v1139, %v651
      %v1145 = vmul.f32 %v1138, %v639
      %v1146 = vmul.f32 %v1136, %v643
      %v1147 = vmul.f32 %v1134, %v647
      %v1148 = vmul.f32 %v1140, %v651
      %v1149 = vpack.c.bf16 %v1145, %v1141
      %v1150 = vpack.c.bf16 %v1146, %v1142
      %v1151 = vpack.c.bf16 %v1147, %v1143
      %v1152 = vpack.c.bf16 %v1148, %v1144
      %1153 = vrot.lane.b32.xlu0 %v925, 112
      %v1154 = vpop.permute.xlu0 %1153
      %1155 = vrot.lane.b32.xlu0 %v929, 112
      %v1156 = vpop.permute.xlu0 %1155
      %1157 = vrot.lane.b32.xlu0 %v926, 112
      %v1158 = vpop.permute.xlu0 %1157
      %1159 = vrot.lane.b32.xlu0 %v930, 112
      %v1160 = vpop.permute.xlu0 %1159
      %1161 = vrot.lane.b32.xlu0 %v927, 112
      %v1162 = vpop.permute.xlu0 %1161
      %1163 = vrot.lane.b32.xlu0 %v931, 112
      %v1164 = vpop.permute.xlu0 %1163
      %1165 = vrot.lane.b32.xlu0 %v928, 112
      %v1166 = vpop.permute.xlu0 %1165
      %1167 = vrot.lane.b32.xlu0 %v932, 112
      %v1168 = vpop.permute.xlu0 %1167
      %v1169 = vsel %vm680, %v1162, %v1166
      %v1170 = vsel %vm680, %v1164, %v1168
      %v1171 = vsel %vm680, %v1158, %v1162
      %v1172 = vsel %vm680, %v1160, %v1164
      %v1173 = vsel %vm680, %v1154, %v1158
      %v1174 = vsel %vm680, %v1156, %v1160
      %v1175 = vsel %vm680, %v1166, %v1154
      %v1176 = vsel %vm680, %v1168, %v1156
      %v1177 = vmul.f32 %v1173, %v692
      %v1178 = vmul.f32 %v1171, %v696
      %v1179 = vmul.f32 %v1169, %v700
      %v1180 = vmul.f32 %v1175, %v704
      %v1181 = vmul.f32 %v1174, %v692
      %v1182 = vmul.f32 %v1172, %v696
      %v1183 = vmul.f32 %v1170, %v700
      %v1184 = vmul.f32 %v1176, %v704
      %v1185 = vpack.c.bf16 %v1181, %v1177
      %v1186 = vpack.c.bf16 %v1182, %v1178
      %v1187 = vpack.c.bf16 %v1183, %v1179
      %v1188 = vpack.c.bf16 %v1184, %v1180
      %1189 = vrot.lane.b32.xlu0 %v925, 111
      %v1190 = vpop.permute.xlu0 %1189
      %1191 = vrot.lane.b32.xlu0 %v929, 111
      %v1192 = vpop.permute.xlu0 %1191
      %1193 = vrot.lane.b32.xlu0 %v926, 111
      %v1194 = vpop.permute.xlu0 %1193
      %1195 = vrot.lane.b32.xlu0 %v930, 111
      %v1196 = vpop.permute.xlu0 %1195
      %1197 = vrot.lane.b32.xlu0 %v927, 111
      %v1198 = vpop.permute.xlu0 %1197
      %1199 = vrot.lane.b32.xlu0 %v931, 111
      %v1200 = vpop.permute.xlu0 %1199
      %1201 = vrot.lane.b32.xlu0 %v928, 111
      %v1202 = vpop.permute.xlu0 %1201
      %1203 = vrot.lane.b32.xlu0 %v932, 111
      %v1204 = vpop.permute.xlu0 %1203
      %v1205 = vsel %vm733, %v1198, %v1202
      %v1206 = vsel %vm733, %v1200, %v1204
      %v1207 = vsel %vm733, %v1194, %v1198
      %v1208 = vsel %vm733, %v1196, %v1200
      %v1209 = vsel %vm733, %v1190, %v1194
      %v1210 = vsel %vm733, %v1192, %v1196
      %v1211 = vsel %vm733, %v1202, %v1190
      %v1212 = vsel %vm733, %v1204, %v1192
      %v1213 = vmul.f32 %v1209, %v745
      %v1214 = vmul.f32 %v1207, %v749
      %v1215 = vmul.f32 %v1205, %v753
      %v1216 = vmul.f32 %v1211, %v757
      %v1217 = vmul.f32 %v1210, %v745
      %v1218 = vmul.f32 %v1208, %v749
      %v1219 = vmul.f32 %v1206, %v753
      %v1220 = vmul.f32 %v1212, %v757
      %v1221 = vpack.c.bf16 %v1217, %v1213
      %v1222 = vpack.c.bf16 %v1218, %v1214
      %v1223 = vpack.c.bf16 %v1219, %v1215
      %v1224 = vpack.c.bf16 %v1220, %v1216
      %v1225 = vld [vmem:[%s2] sm:$0xff]
      %v1226 = vld [vmem:[%s2 + $0x8] sm:$0xff]
      %v1229 = vunpack.c.l.b16 %v1225
      %v1230 = vunpack.c.h.b16 %v1225
      %v1231 = vunpack.c.l.b16 %v1226
      %v1232 = vunpack.c.h.b16 %v1226
      %v1233 = vpack.c.b16 %v1231, %v1229
      %v1234 = vpack.c.b16 %v1232, %v1230
      %v1237 = vsel %vm792, %v1234, 0
      %1239 = vmatprep.subr.bf16.mxu0 %v966
      %1240 = vmatpush1.bf16.msra.mxu0 %v965
      %1241 = vmatprep.subr.bf16.mxu0 %v1002
      %1242 = vmatpush1.bf16.msra.mxu0 %v1001
      %1243 = vmatprep.subr.bf16.mxu0 %v1038
      %1244 = vmatpush1.bf16.msra.mxu0 %v1037
      %1245 = vmatprep.subr.bf16.mxu0 %v1074
      %1246 = vmatpush1.bf16.msra.mxu0 %v1073
      %1247 = vmatprep.subr.bf16.mxu0 %v1078
      %1248 = vmatpush1.bf16.msra.mxu0 %v1077
      %1249 = vmatprep.subr.bf16.mxu0 %v1114
      %1250 = vmatpush1.bf16.msra.mxu0 %v1113
      %1251 = vmatprep.subr.bf16.mxu0 %v1150
      %1252 = vmatpush1.bf16.msra.mxu0 %v1149
      %1253 = vmatprep.subr.bf16.mxu0 %v1186
      %1254 = vmatpush1.bf16.msra.mxu0 %v1185
      %1255 = vmatprep.subr.bf16.mxu0 %v1222
      %1256 = vmatpush1.bf16.msra.mxu0 %v1221
      %1257 = vmatprep.subr.bf16.mxu0 0
      %1258 = vmatpush1.bf16.msra.mxu0 0
      %1259 = vmatprep.subr.bf16.mxu0 0
      %1260 = vmatpush1.bf16.msra.mxu0 0
      %1261 = vmatprep.subr.bf16.mxu0 0
      %1262 = vmatpush1.bf16.msra.mxu0 0
      %1263 = vmatprep.subr.bf16.mxu0 0
      %1264 = vmatpush1.bf16.msra.mxu0 0
      %1265 = vmatprep.subr.bf16.mxu0 0
      %1266 = vmatpush1.bf16.msra.mxu0 0
      %1267 = vmatprep.subr.bf16.mxu0 0
      %1268 = vmatpush1.bf16.msra.mxu0 0
      %1269 = vmatprep.subr.bf16.mxu0 0
      %1270 = vmatpush1.bf16.msra.mxu0 0
      %1271 = vmatprep.mubr.bf16.mxu0 %v1237
      %1272 = vmatmul.mubr.bf16.gmra.mrb[0].mxu0 %v1233
      %v1273 = vpop.f32.mrb[0].mxu0
      %v1274 = vadd.f32 %v844, %v1273
      %v1275 = vpop.f32.mrb[0].mxu0
      %v1276 = vadd.f32 %v846, %v1275
      %v1277 = vpop.f32.mrb[0].mxu0
      %v1278 = vadd.f32 %v848, %v1277
      %v1279 = vpop.f32.mrb[0].mxu0
      %v1280 = vadd.f32 %v850, %v1279
      %1281 = vdwg.mxu0
      %1282 = vmatprep.subr.bf16.mxu0 %v968
      %1283 = vmatpush1.bf16.msra.mxu0 %v967
      %1284 = vmatprep.subr.bf16.mxu0 %v1004
      %1285 = vmatpush1.bf16.msra.mxu0 %v1003
      %1286 = vmatprep.subr.bf16.mxu0 %v1040
      %1287 = vmatpush1.bf16.msra.mxu0 %v1039
      %1288 = vmatprep.subr.bf16.mxu0 %v1076
      %1289 = vmatpush1.bf16.msra.mxu0 %v1075
      %1290 = vmatprep.subr.bf16.mxu0 %v1080
      %1291 = vmatpush1.bf16.msra.mxu0 %v1079
      %1292 = vmatprep.subr.bf16.mxu0 %v1116
      %1293 = vmatpush1.bf16.msra.mxu0 %v1115
      %1294 = vmatprep.subr.bf16.mxu0 %v1152
      %1295 = vmatpush1.bf16.msra.mxu0 %v1151
      %1296 = vmatprep.subr.bf16.mxu0 %v1188
      %1297 = vmatpush1.bf16.msra.mxu0 %v1187
      %1298 = vmatprep.subr.bf16.mxu0 %v1224
      %1299 = vmatpush1.bf16.msra.mxu0 %v1223
      %1300 = vmatprep.subr.bf16.mxu0 0
      %1301 = vmatpush1.bf16.msra.mxu0 0
      %1302 = vmatprep.subr.bf16.mxu0 0
      %1303 = vmatpush1.bf16.msra.mxu0 0
      %1304 = vmatprep.subr.bf16.mxu0 0
      %1305 = vmatpush1.bf16.msra.mxu0 0
      %1306 = vmatprep.subr.bf16.mxu0 0
      %1307 = vmatpush1.bf16.msra.mxu0 0
      %1308 = vmatprep.subr.bf16.mxu0 0
      %1309 = vmatpush1.bf16.msra.mxu0 0
      %1310 = vmatprep.subr.bf16.mxu0 0
      %1311 = vmatpush1.bf16.msra.mxu0 0
      %1312 = vmatprep.subr.bf16.mxu0 0
      %1313 = vmatpush1.bf16.msra.mxu0 0
      %1314 = vmatprep.mubr.bf16.mxu0 %v1237
      %1315 = vmatmul.mubr.bf16.gmra.mrb[0].mxu0 %v1233
      %v1316 = vpop.f32.mrb[0].mxu0
      %v1317 = vadd.f32 %v897, %v1316
      %v1318 = vpop.f32.mrb[0].mxu0
      %v1319 = vadd.f32 %v899, %v1318
      %v1320 = vpop.f32.mrb[0].mxu0
      %v1321 = vadd.f32 %v901, %v1320
      %v1322 = vpop.f32.mrb[0].mxu0
      %v1323 = vadd.f32 %v903, %v1322
      %1324 = vdwg.mxu0
      %1325 = vst [vmem:[%s278] sm:$0xff] %v1274
      %1326 = vst [vmem:[%s278 + $0x8] sm:$0xff] %v1276
      %1327 = vst [vmem:[%s278 + $0x10] sm:$0xff] %v1317
      %1328 = vst [vmem:[%s278 + $0x18] sm:$0xff] %v1319
      %1329 = vst [vmem:[%s278 + $0x20] sm:$0xff] %v1278
      %1330 = vst [vmem:[%s278 + $0x28] sm:$0xff] %v1280
      %1331 = vst [vmem:[%s278 + $0x30] sm:$0xff] %v1321
      %1332 = vst [vmem:[%s278 + $0x38] sm:$0xff] %v1323
      %p1333 = scmp.lt.s32.totalorder %s18, 1
      %s1334 = scalar_select %p1333, %s18, 1
      %s1335 = smul.addr %s1334, 8
      %s1336 = smul.addr %s1335, 8
      %s1337 = scalar_lea.vmem %s7, %s1336
      // Predicated region
      $region49: #{dead_preact_block.1} parent=47 // pred_check
        %p1338 = pneg %p188
      $region50: #{dead_preact_block.1} parent=47 // pred_check_branch
        %1340 = sbr.rel (%p1338) target = $region52
      $region51: #{dead_preact_block.1} parent=47 // pred_region
        _
      $region52: #{dead_preact_block.1} parent=47 // pred_fallthru
        _
    $region48: #{dead_preact_block.1} parent=5 // pred_fallthru
      _
    %p1341 = scmp.le.s32.totalorder 2, %s13
    // Predicated region
    $region53: #{dead_preact_block.1} parent=5 // pred_check
      %p1342 = pneg %p1341
    $region54: #{dead_preact_block.1} parent=5 // pred_check_branch
      %1344 = sbr.rel (%p1342) target = $region56
    $region55: #{dead_preact_block.1} parent=5 // pred_region
      %s1345 = ssub.s32 %s13, 2
      // Predicated region
      $region57: #{dead_preact_block.1} parent=55 // pred_check
        %p1346 = pneg %p194
      $region58: #{dead_preact_block.1} parent=55 // pred_check_branch
        %1348 = sbr.rel (%p1346) target = $region60
      $region59: #{dead_preact_block.1} parent=55 // pred_region
        %p1349 = scmp.lt.s32.totalorder %s19, 1
        %s1350 = scalar_select %p1349, %s19, 1
        %s1351 = smul.addr %s1350, 8
        %s1352 = smul.addr %s1351, 8
        %s1353 = scalar_lea.vmem %s7, %s1352
      $region60: #{dead_preact_block.1} parent=55 // pred_fallthru
        _
    $region56: #{dead_preact_block.1} parent=5 // pred_fallthru
      _
  $region6: #{dead_preact_block.1} parent=0 // loop_footer
    %s17 = sadd.s32 1, %s13
  $region7: #{dead_preact_block.1} parent=0 // loop_footer_branch
    %12 = sbr.rel target = $region3
  $region8: #{dead_preact_block.1} parent=0 // loop_exit
    _

</llo_original>
